<compile_context>
chip_gen: v5e
topology: v5e:2x2
jax: 0.10.0
libtpu: 0.0.40
codegen_flags: <defaults>
</compile_context>

<pallas_src>
import jax
import jax.numpy as jnp
from jax import lax
from jax.experimental import pallas as pl
from jax.experimental.pallas import tpu as pltpu


def _bilstm_kernel(x_ref,            # (T, B, nIn)      time-major input
                   wih_ref,          # (nIn, 8H)        [fwd i|f|g|o | bwd i|f|g|o]
                   b_ref,            # (1, 8H)          fused b_ih + b_hh, both dirs
                   whh_f_ref,        # (H, 4H)          forward recurrent weights
                   whh_b_ref,        # (H, 4H)          backward recurrent weights
                   wef_ref,          # (H, nOut_pad)    forward half of embedding
                   web_ref,          # (H, nOut_pad)    backward half of embedding
                   be_ref,           # (1, nOut_pad)    bias (-1e30 in padded cols)
                   out_ref,          # (T*B, nOut_pad)
                   gx_ref,           # scratch (T, B, 8H)  fused input projections
                   hf_ref,           # scratch (T, B, H)   forward hidden states
                   hb_ref):          # scratch (T, B, H)   backward hidden states
    T, B, nIn = x_ref.shape
    H = whh_f_ref.shape[0]
    G = 4 * H

    # ---- fused input projection: ONE wide matmul for both directions & all gates ----
    x2d = x_ref[...].reshape(T * B, nIn)
    gx_ref[...] = (jnp.dot(x2d, wih_ref[...], preferred_element_type=jnp.float32)
                   + b_ref[...]).reshape(T, B, 2 * G)

    # ---- loop-invariant recurrent weights: one (H, 4H) matrix per direction ----
    whh_f = whh_f_ref[...]
    whh_b = whh_b_ref[...]

    def cell(gx_t, h, c, whh):
        # gx_t: (B, 4H) input projection (bias included); one fused MXU push per step.
        g = gx_t + jnp.dot(h, whh, preferred_element_type=jnp.float32)
        i = jax.nn.sigmoid(g[:, 0 * H:1 * H])
        f = jax.nn.sigmoid(g[:, 1 * H:2 * H])
        gg = jnp.tanh(g[:, 2 * H:3 * H])
        o = jax.nn.sigmoid(g[:, 3 * H:4 * H])
        c_new = f * c + i * gg
        h_new = o * jnp.tanh(c_new)
        return h_new, c_new

    # ---- fused forward/backward recurrence (two independent chains per iteration) ----
    z = jnp.zeros((B, H), jnp.float32)

    def step(s, carry):
        hf, cf, hb, cb = carry
        tb = T - 1 - s
        hf, cf = cell(gx_ref[s][:, :G], hf, cf, whh_f)    # fwd gates: lanes 0:4H
        hb, cb = cell(gx_ref[tb][:, G:], hb, cb, whh_b)   # bwd gates: lanes 4H:8H
        hf_ref[s] = hf
        hb_ref[tb] = hb
        return hf, cf, hb, cb

    lax.fori_loop(0, T, step, (z, z, z, z), unroll=True)

    # ---- embedding (Linear) + softmax; no concatenate; lane-dense padded output ----
    rec_f = hf_ref[...].reshape(T * B, H)
    rec_b = hb_ref[...].reshape(T * B, H)
    logits = (jnp.dot(rec_f, wef_ref[...], preferred_element_type=jnp.float32)
              + jnp.dot(rec_b, web_ref[...], preferred_element_type=jnp.float32)
              + be_ref[...])
    logits = logits - jnp.max(logits, axis=-1, keepdims=True)
    ex = jnp.exp(logits)
    denom = jnp.sum(ex, axis=-1, keepdims=True)
    out_ref[...] = (ex * pl.reciprocal(denom, approx=True)).astype(out_ref.dtype)


def bidirectional_lstm_pallas(x, params):
    """x: (B, T, nIn) float32. Returns (B, T, nOut) softmax probabilities."""
    B, T, nIn = x.shape
    H = params["whh_f"].shape[0]
    nOut = params["w_emb"].shape[1]
    nOut_pad = ((nOut + 127) // 128) * 128

    # TODO(synk): fold this transpose (and the output one) into BlockSpec index_maps
    #             once the kernel is gridded; at production T*B they are extra HBM passes.
    x_tm = jnp.transpose(x, (1, 0, 2))  # (T, B, nIn) time-major

    # Fused input-projection weight/bias: [fwd i|f|g|o | bwd i|f|g|o] along N.
    wih = jnp.concatenate([params["wih_f"], params["wih_b"]], axis=1)    # (nIn, 8H)
    b_ih = jnp.concatenate([params["b_f"], params["b_b"]], axis=1)       # (1, 8H)

    # Lane-dense padded embedding: zero weight cols + -1e30 bias cols keep the softmax
    # of the real columns unchanged; padded columns come out as exactly 0.
    pad = nOut_pad - nOut
    w_emb_f = jnp.pad(params["w_emb"][:H], ((0, 0), (0, pad)))           # (H, nOut_pad)
    w_emb_b = jnp.pad(params["w_emb"][H:], ((0, 0), (0, pad)))           # (H, nOut_pad)
    b_emb = jnp.pad(params["b_emb"], ((0, 0), (0, pad)),
                    constant_values=-1e30)                               # (1, nOut_pad)

    vmem = pl.BlockSpec(memory_space=pltpu.MemorySpace.VMEM)

    out2d = pl.pallas_call(
        _bilstm_kernel,
        out_shape=jax.ShapeDtypeStruct((T * B, nOut_pad), jnp.float32),
        in_specs=[vmem] * 8,
        out_specs=vmem,
        scratch_shapes=[pltpu.VMEM((T, B, 8 * H), jnp.float32),
                        pltpu.VMEM((T, B, H), jnp.float32),
                        pltpu.VMEM((T, B, H), jnp.float32)],
        compiler_params=pltpu.CompilerParams(vmem_limit_bytes=64 * 1024 * 1024),
    )(x_tm, wih, b_ih, params["whh_f"], params["whh_b"], w_emb_f, w_emb_b, b_emb)

    out = out2d.reshape(T, B, nOut_pad)[:, :, :nOut]   # drop lane padding
    return jnp.transpose(out, (1, 0, 2))               # (B, T, nOut)


# ------------------------- pure-JAX reference ------------------------------
def _ref_forward(x, params):
    B, T, nIn = x.shape
    H = params["whh_f"].shape[0]

    def run_dir(wih, whh, b, reverse):
        h = jnp.zeros((B, H), jnp.float32)
        c = jnp.zeros((B, H), jnp.float32)
        outs = [None] * T
        order = range(T - 1, -1, -1) if reverse else range(T)
        for t in order:
            gates = x[:, t, :] @ wih + h @ whh + b
            i = jax.nn.sigmoid(gates[:, 0 * H:1 * H])
            f = jax.nn.sigmoid(gates[:, 1 * H:2 * H])
            g = jnp.tanh(gates[:, 2 * H:3 * H])
            o = jax.nn.sigmoid(gates[:, 3 * H:4 * H])
            c = f * c + i * g
            h = o * jnp.tanh(c)
            outs[t] = h
        return jnp.stack(outs, axis=1)  # (B, T, H)

    hf = run_dir(params["wih_f"], params["whh_f"], params["b_f"], False)
    hb = run_dir(params["wih_b"], params["whh_b"], params["b_b"], True)
    rec = jnp.concatenate([hf, hb], axis=-1)                   # (B, T, 2H)
    logits = rec @ params["w_emb"] + params["b_emb"]           # (B, T, nOut)
    return jax.nn.softmax(logits, axis=-1)


# ------------------------------- main ---------------------------------------
def _init_params(key, nIn, H, nOut):
    ks = jax.random.split(key, 10)
    s = 1.0 / jnp.sqrt(H)

    def u(k, shape):
        return jax.random.uniform(k, shape, jnp.float32, -s, s)

    return {
        # weights stored pre-transposed: x @ W_ih^T  ->  x @ wih with wih (nIn, 4H)
        "wih_f": u(ks[0], (nIn, 4 * H)),
        "whh_f": u(ks[1], (H, 4 * H)),
        "b_f":   u(ks[2], (1, 4 * H)) + u(ks[3], (1, 4 * H)),  # b_ih + b_hh
        "wih_b": u(ks[4], (nIn, 4 * H)),
        "whh_b": u(ks[5], (H, 4 * H)),
        "b_b":   u(ks[6], (1, 4 * H)) + u(ks[7], (1, 4 * H)),
        "w_emb": u(ks[8], (2 * H, nOut)),
        "b_emb": u(ks[9], (1, nOut)),
    }


if __name__ == "__main__":
    B, T, nIn, H, nOut = 2, 8, 16, 32, 16

    key = jax.random.PRNGKey(0)
    kx, kp = jax.random.split(key)
    x = jax.random.normal(kx, (B, T, nIn), jnp.float32)
    params = _init_params(kp, nIn, H, nOut)

    out = bidirectional_lstm_pallas(x, params)
    out = jax.block_until_ready(out)

    ref = _ref_forward(x, params)
    assert out.shape == (B, T, nOut)
    # approx=True reciprocal in the softmax -> allow small drift vs the exact reference
    assert jnp.allclose(out, ref, atol=2e-3, rtol=2e-3), "mismatch vs reference"
    # dropout_1 is defined in the PyTorch __init__ but never used in forward -> no-op.
    print("KERNEL_OK")
</pallas_src>

<mosaic_0001>
module attributes {stable_mosaic.version = 11 : i64} {
  func.func @_bilstm_kernel(%arg0: memref<8x2x16xf32, #tpu.memory_space<vmem>>, %arg1: memref<16x256xf32, #tpu.memory_space<vmem>>, %arg2: memref<1x256xf32, #tpu.memory_space<vmem>>, %arg3: memref<32x128xf32, #tpu.memory_space<vmem>>, %arg4: memref<32x128xf32, #tpu.memory_space<vmem>>, %arg5: memref<32x128xf32, #tpu.memory_space<vmem>>, %arg6: memref<32x128xf32, #tpu.memory_space<vmem>>, %arg7: memref<1x128xf32, #tpu.memory_space<vmem>>, %arg8: memref<16x128xf32, #tpu.memory_space<vmem>>, %arg9: memref<8x2x256xf32, #tpu.memory_space<vmem>>, %arg10: memref<8x2x32xf32, #tpu.memory_space<vmem>>, %arg11: memref<8x2x32xf32, #tpu.memory_space<vmem>>) attributes {dimension_semantics = [], scalar_prefetch = 0 : i64, scratch_operands = 3 : i64, tpu.core_type = #tpu.core_type<tc>} {
    %c0 = arith.constant 0 : index
    %c0_0 = arith.constant 0 : index
    %c0_1 = arith.constant 0 : index
    %0 = vector.load %arg0[%c0, %c0_0, %c0_1] : memref<8x2x16xf32, #tpu.memory_space<vmem>>, vector<8x2x16xf32>
    %1 = vector.shape_cast %0 : vector<8x2x16xf32> to vector<16x16xf32>
    %c0_2 = arith.constant 0 : index
    %c0_3 = arith.constant 0 : index
    %2 = vector.load %arg1[%c0_2, %c0_3] : memref<16x256xf32, #tpu.memory_space<vmem>>, vector<16x256xf32>
    %cst = arith.constant dense<0.000000e+00> : vector<16x256xf32>
    %3 = tpu.matmul %1, %2, %cst {dimension_numbers = #tpu.dot_dimension_numbers<[1], [0], [0], [1], [0, 0, 1, 1], [], []>} : vector<16x16xf32>, vector<16x256xf32>, vector<16x256xf32> -> vector<16x256xf32>
    %c0_4 = arith.constant 0 : index
    %c0_5 = arith.constant 0 : index
    %4 = vector.load %arg2[%c0_4, %c0_5] : memref<1x256xf32, #tpu.memory_space<vmem>>, vector<1x256xf32>
    %5 = vector.broadcast %4 : vector<1x256xf32> to vector<16x256xf32>
    %6 = arith.addf %3, %5 : vector<16x256xf32>
    %7 = vector.shape_cast %6 : vector<16x256xf32> to vector<8x2x256xf32>
    %c0_6 = arith.constant 0 : index
    %c0_7 = arith.constant 0 : index
    %c0_8 = arith.constant 0 : index
    %8 = vector.load %arg9[%c0_6, %c0_7, %c0_8] : memref<8x2x256xf32, #tpu.memory_space<vmem>>, vector<8x2x256xf32>
    tpu.vector_store %arg9[%c0_6, %c0_7, %c0_8], %7 {strides = array<i32>} : memref<8x2x256xf32, #tpu.memory_space<vmem>>, vector<8x2x256xf32>,
    %c0_9 = arith.constant 0 : index
    %c0_10 = arith.constant 0 : index
    %9 = vector.load %arg3[%c0_9, %c0_10] : memref<32x128xf32, #tpu.memory_space<vmem>>, vector<32x128xf32>
    %c0_11 = arith.constant 0 : index
    %c0_12 = arith.constant 0 : index
    %10 = vector.load %arg4[%c0_11, %c0_12] : memref<32x128xf32, #tpu.memory_space<vmem>>, vector<32x128xf32>
    %cst_13 = arith.constant 0.000000e+00 : f32
    %11 = vector.broadcast %cst_13 : f32 to vector<2x32xf32>
    %c0_i32 = arith.constant 0 : i32
    %c7_i32 = arith.constant 7 : i32
    %12 = arith.subi %c7_i32, %c0_i32 : i32
    %13 = arith.index_cast %c0_i32 : i32 to index
    %c0_14 = arith.constant 0 : index
    %c0_15 = arith.constant 0 : index
    %14 = vector.load %arg9[%13, %c0_14, %c0_15] : memref<8x2x256xf32, #tpu.memory_space<vmem>>, vector<1x2x256xf32>
    %15 = vector.shape_cast %14 : vector<1x2x256xf32> to vector<2x256xf32>
    %16 = vector.extract_strided_slice %15 {offsets = [0, 0], sizes = [2, 128], strides = [1, 1]} : vector<2x256xf32> to vector<2x128xf32>
    %cst_16 = arith.constant dense<0.000000e+00> : vector<2x128xf32>
    %17 = tpu.matmul %11, %9, %cst_16 {dimension_numbers = #tpu.dot_dimension_numbers<[1], [0], [0], [1], [0, 0, 1, 1], [], []>} : vector<2x32xf32>, vector<32x128xf32>, vector<2x128xf32> -> vector<2x128xf32>
    %18 = arith.addf %16, %17 : vector<2x128xf32>
    %19 = vector.extract_strided_slice %18 {offsets = [0, 0], sizes = [2, 32], strides = [1, 1]} : vector<2x128xf32> to vector<2x32xf32>
    %20 = arith.negf %19 : vector<2x32xf32>
    %21 = math.exp %20 : vector<2x32xf32>
    %cst_17 = arith.constant 1.000000e+00 : f32
    %22 = vector.broadcast %cst_17 : f32 to vector<2x32xf32>
    %23 = arith.addf %22, %21 : vector<2x32xf32>
    %24 = arith.divf %22, %23 : vector<2x32xf32>
    %25 = vector.extract_strided_slice %18 {offsets = [0, 32], sizes = [2, 32], strides = [1, 1]} : vector<2x128xf32> to vector<2x32xf32>
    %26 = arith.negf %25 : vector<2x32xf32>
    %27 = math.exp %26 : vector<2x32xf32>
    %cst_18 = arith.constant 1.000000e+00 : f32
    %28 = vector.broadcast %cst_18 : f32 to vector<2x32xf32>
    %29 = arith.addf %28, %27 : vector<2x32xf32>
    %30 = arith.divf %28, %29 : vector<2x32xf32>
    %31 = vector.extract_strided_slice %18 {offsets = [0, 64], sizes = [2, 32], strides = [1, 1]} : vector<2x128xf32> to vector<2x32xf32>
    %32 = math.tanh %31 : vector<2x32xf32>
    %33 = vector.extract_strided_slice %18 {offsets = [0, 96], sizes = [2, 32], strides = [1, 1]} : vector<2x128xf32> to vector<2x32xf32>
    %34 = arith.negf %33 : vector<2x32xf32>
    %35 = math.exp %34 : vector<2x32xf32>
    %cst_19 = arith.constant 1.000000e+00 : f32
    %36 = vector.broadcast %cst_19 : f32 to vector<2x32xf32>
    %37 = arith.addf %36, %35 : vector<2x32xf32>
    %38 = arith.divf %36, %37 : vector<2x32xf32>
    %39 = arith.mulf %30, %11 : vector<2x32xf32>
    %40 = arith.mulf %24, %32 : vector<2x32xf32>
    %41 = arith.addf %39, %40 : vector<2x32xf32>
    %42 = math.tanh %41 : vector<2x32xf32>
    %43 = arith.mulf %38, %42 : vector<2x32xf32>
    %44 = arith.index_cast %12 : i32 to index
    %c0_20 = arith.constant 0 : index
    %c0_21 = arith.constant 0 : index
    %45 = vector.load %arg9[%44, %c0_20, %c0_21] : memref<8x2x256xf32, #tpu.memory_space<vmem>>, vector<1x2x256xf32>
    %46 = vector.shape_cast %45 : vector<1x2x256xf32> to vector<2x256xf32>
    %47 = vector.extract_strided_slice %46 {offsets = [0, 128], sizes = [2, 128], strides = [1, 1]} : vector<2x256xf32> to vector<2x128xf32>
    %cst_22 = arith.constant dense<0.000000e+00> : vector<2x128xf32>
    %48 = tpu.matmul %11, %10, %cst_22 {dimension_numbers = #tpu.dot_dimension_numbers<[1], [0], [0], [1], [0, 0, 1, 1], [], []>} : vector<2x32xf32>, vector<32x128xf32>, vector<2x128xf32> -> vector<2x128xf32>
    %49 = arith.addf %47, %48 : vector<2x128xf32>
    %50 = vector.extract_strided_slice %49 {offsets = [0, 0], sizes = [2, 32], strides = [1, 1]} : vector<2x128xf32> to vector<2x32xf32>
    %51 = arith.negf %50 : vector<2x32xf32>
    %52 = math.exp %51 : vector<2x32xf32>
    %cst_23 = arith.constant 1.000000e+00 : f32
    %53 = vector.broadcast %cst_23 : f32 to vector<2x32xf32>
    %54 = arith.addf %53, %52 : vector<2x32xf32>
    %55 = arith.divf %53, %54 : vector<2x32xf32>
    %56 = vector.extract_strided_slice %49 {offsets = [0, 32], sizes = [2, 32], strides = [1, 1]} : vector<2x128xf32> to vector<2x32xf32>
    %57 = arith.negf %56 : vector<2x32xf32>
    %58 = math.exp %57 : vector<2x32xf32>
    %cst_24 = arith.constant 1.000000e+00 : f32
    %59 = vector.broadcast %cst_24 : f32 to vector<2x32xf32>
    %60 = arith.addf %59, %58 : vector<2x32xf32>
    %61 = arith.divf %59, %60 : vector<2x32xf32>
    %62 = vector.extract_strided_slice %49 {offsets = [0, 64], sizes = [2, 32], strides = [1, 1]} : vector<2x128xf32> to vector<2x32xf32>
    %63 = math.tanh %62 : vector<2x32xf32>
    %64 = vector.extract_strided_slice %49 {offsets = [0, 96], sizes = [2, 32], strides = [1, 1]} : vector<2x128xf32> to vector<2x32xf32>
    %65 = arith.negf %64 : vector<2x32xf32>
    %66 = math.exp %65 : vector<2x32xf32>
    %cst_25 = arith.constant 1.000000e+00 : f32
    %67 = vector.broadcast %cst_25 : f32 to vector<2x32xf32>
    %68 = arith.addf %67, %66 : vector<2x32xf32>
    %69 = arith.divf %67, %68 : vector<2x32xf32>
    %70 = arith.mulf %61, %11 : vector<2x32xf32>
    %71 = arith.mulf %55, %63 : vector<2x32xf32>
    %72 = arith.addf %70, %71 : vector<2x32xf32>
    %73 = math.tanh %72 : vector<2x32xf32>
    %74 = arith.mulf %69, %73 : vector<2x32xf32>
    %75 = arith.index_cast %c0_i32 : i32 to index
    %c0_26 = arith.constant 0 : index
    %c0_27 = arith.constant 0 : index
    %76 = vector.load %arg10[%75, %c0_26, %c0_27] : memref<8x2x32xf32, #tpu.memory_space<vmem>>, vector<1x2x32xf32>
    %77 = vector.shape_cast %76 : vector<1x2x32xf32> to vector<2x32xf32>
    %78 = vector.shape_cast %43 : vector<2x32xf32> to vector<1x2x32xf32>
    tpu.vector_store %arg10[%75, %c0_26, %c0_27], %78 {strides = array<i32>} : memref<8x2x32xf32, #tpu.memory_space<vmem>>, vector<1x2x32xf32>,
    %79 = arith.index_cast %12 : i32 to index
    %c0_28 = arith.constant 0 : index
    %c0_29 = arith.constant 0 : index
    %80 = vector.load %arg11[%79, %c0_28, %c0_29] : memref<8x2x32xf32, #tpu.memory_space<vmem>>, vector<1x2x32xf32>
    %81 = vector.shape_cast %80 : vector<1x2x32xf32> to vector<2x32xf32>
    %82 = vector.shape_cast %74 : vector<2x32xf32> to vector<1x2x32xf32>
    tpu.vector_store %arg11[%79, %c0_28, %c0_29], %82 {strides = array<i32>} : memref<8x2x32xf32, #tpu.memory_space<vmem>>, vector<1x2x32xf32>,
    %c1_i32 = arith.constant 1 : i32
    %c7_i32_30 = arith.constant 7 : i32
    %83 = arith.subi %c7_i32_30, %c1_i32 : i32
    %84 = arith.index_cast %c1_i32 : i32 to index
    %c0_31 = arith.constant 0 : index
    %c0_32 = arith.constant 0 : index
    %85 = vector.load %arg9[%84, %c0_31, %c0_32] : memref<8x2x256xf32, #tpu.memory_space<vmem>>, vector<1x2x256xf32>
    %86 = vector.shape_cast %85 : vector<1x2x256xf32> to vector<2x256xf32>
    %87 = vector.extract_strided_slice %86 {offsets = [0, 0], sizes = [2, 128], strides = [1, 1]} : vector<2x256xf32> to vector<2x128xf32>
    %cst_33 = arith.constant dense<0.000000e+00> : vector<2x128xf32>
    %88 = tpu.matmul %43, %9, %cst_33 {dimension_numbers = #tpu.dot_dimension_numbers<[1], [0], [0], [1], [0, 0, 1, 1], [], []>} : vector<2x32xf32>, vector<32x128xf32>, vector<2x128xf32> -> vector<2x128xf32>
    %89 = arith.addf %87, %88 : vector<2x128xf32>
    %90 = vector.extract_strided_slice %89 {offsets = [0, 0], sizes = [2, 32], strides = [1, 1]} : vector<2x128xf32> to vector<2x32xf32>
    %91 = arith.negf %90 : vector<2x32xf32>
    %92 = math.exp %91 : vector<2x32xf32>
    %cst_34 = arith.constant 1.000000e+00 : f32
    %93 = vector.broadcast %cst_34 : f32 to vector<2x32xf32>
    %94 = arith.addf %93, %92 : vector<2x32xf32>
    %95 = arith.divf %93, %94 : vector<2x32xf32>
    %96 = vector.extract_strided_slice %89 {offsets = [0, 32], sizes = [2, 32], strides = [1, 1]} : vector<2x128xf32> to vector<2x32xf32>
    %97 = arith.negf %96 : vector<2x32xf32>
    %98 = math.exp %97 : vector<2x32xf32>
    %cst_35 = arith.constant 1.000000e+00 : f32
    %99 = vector.broadcast %cst_35 : f32 to vector<2x32xf32>
    %100 = arith.addf %99, %98 : vector<2x32xf32>
    %101 = arith.divf %99, %100 : vector<2x32xf32>
    %102 = vector.extract_strided_slice %89 {offsets = [0, 64], sizes = [2, 32], strides = [1, 1]} : vector<2x128xf32> to vector<2x32xf32>
    %103 = math.tanh %102 : vector<2x32xf32>
    %104 = vector.extract_strided_slice %89 {offsets = [0, 96], sizes = [2, 32], strides = [1, 1]} : vector<2x128xf32> to vector<2x32xf32>
    %105 = arith.negf %104 : vector<2x32xf32>
    %106 = math.exp %105 : vector<2x32xf32>
    %cst_36 = arith.constant 1.000000e+00 : f32
    %107 = vector.broadcast %cst_36 : f32 to vector<2x32xf32>
    %108 = arith.addf %107, %106 : vector<2x32xf32>
    %109 = arith.divf %107, %108 : vector<2x32xf32>
    %110 = arith.mulf %101, %41 : vector<2x32xf32>
    %111 = arith.mulf %95, %103 : vector<2x32xf32>
    %112 = arith.addf %110, %111 : vector<2x32xf32>
    %113 = math.tanh %112 : vector<2x32xf32>
    %114 = arith.mulf %109, %113 : vector<2x32xf32>
    %115 = arith.index_cast %83 : i32 to index
    %c0_37 = arith.constant 0 : index
    %c0_38 = arith.constant 0 : index
    %116 = vector.load %arg9[%115, %c0_37, %c0_38] : memref<8x2x256xf32, #tpu.memory_space<vmem>>, vector<1x2x256xf32>
    %117 = vector.shape_cast %116 : vector<1x2x256xf32> to vector<2x256xf32>
    %118 = vector.extract_strided_slice %117 {offsets = [0, 128], sizes = [2, 128], strides = [1, 1]} : vector<2x256xf32> to vector<2x128xf32>
    %cst_39 = arith.constant dense<0.000000e+00> : vector<2x128xf32>
    %119 = tpu.matmul %74, %10, %cst_39 {dimension_numbers = #tpu.dot_dimension_numbers<[1], [0], [0], [1], [0, 0, 1, 1], [], []>} : vector<2x32xf32>, vector<32x128xf32>, vector<2x128xf32> -> vector<2x128xf32>
    %120 = arith.addf %118, %119 : vector<2x128xf32>
    %121 = vector.extract_strided_slice %120 {offsets = [0, 0], sizes = [2, 32], strides = [1, 1]} : vector<2x128xf32> to vector<2x32xf32>
    %122 = arith.negf %121 : vector<2x32xf32>
    %123 = math.exp %122 : vector<2x32xf32>
    %cst_40 = arith.constant 1.000000e+00 : f32
    %124 = vector.broadcast %cst_40 : f32 to vector<2x32xf32>
    %125 = arith.addf %124, %123 : vector<2x32xf32>
    %126 = arith.divf %124, %125 : vector<2x32xf32>
    %127 = vector.extract_strided_slice %120 {offsets = [0, 32], sizes = [2, 32], strides = [1, 1]} : vector<2x128xf32> to vector<2x32xf32>
    %128 = arith.negf %127 : vector<2x32xf32>
    %129 = math.exp %128 : vector<2x32xf32>
    %cst_41 = arith.constant 1.000000e+00 : f32
    %130 = vector.broadcast %cst_41 : f32 to vector<2x32xf32>
    %131 = arith.addf %130, %129 : vector<2x32xf32>
    %132 = arith.divf %130, %131 : vector<2x32xf32>
    %133 = vector.extract_strided_slice %120 {offsets = [0, 64], sizes = [2, 32], strides = [1, 1]} : vector<2x128xf32> to vector<2x32xf32>
    %134 = math.tanh %133 : vector<2x32xf32>
    %135 = vector.extract_strided_slice %120 {offsets = [0, 96], sizes = [2, 32], strides = [1, 1]} : vector<2x128xf32> to vector<2x32xf32>
    %136 = arith.negf %135 : vector<2x32xf32>
    %137 = math.exp %136 : vector<2x32xf32>
    %cst_42 = arith.constant 1.000000e+00 : f32
    %138 = vector.broadcast %cst_42 : f32 to vector<2x32xf32>
    %139 = arith.addf %138, %137 : vector<2x32xf32>
    %140 = arith.divf %138, %139 : vector<2x32xf32>
    %141 = arith.mulf %132, %72 : vector<2x32xf32>
    %142 = arith.mulf %126, %134 : vector<2x32xf32>
    %143 = arith.addf %141, %142 : vector<2x32xf32>
    %144 = math.tanh %143 : vector<2x32xf32>
    %145 = arith.mulf %140, %144 : vector<2x32xf32>
    %146 = arith.index_cast %c1_i32 : i32 to index
    %c0_43 = arith.constant 0 : index
    %c0_44 = arith.constant 0 : index
    %147 = vector.load %arg10[%146, %c0_43, %c0_44] : memref<8x2x32xf32, #tpu.memory_space<vmem>>, vector<1x2x32xf32>
    %148 = vector.shape_cast %147 : vector<1x2x32xf32> to vector<2x32xf32>
    %149 = vector.shape_cast %114 : vector<2x32xf32> to vector<1x2x32xf32>
    tpu.vector_store %arg10[%146, %c0_43, %c0_44], %149 {strides = array<i32>} : memref<8x2x32xf32, #tpu.memory_space<vmem>>, vector<1x2x32xf32>,
    %150 = arith.index_cast %83 : i32 to index
    %c0_45 = arith.constant 0 : index
    %c0_46 = arith.constant 0 : index
    %151 = vector.load %arg11[%150, %c0_45, %c0_46] : memref<8x2x32xf32, #tpu.memory_space<vmem>>, vector<1x2x32xf32>
    %152 = vector.shape_cast %151 : vector<1x2x32xf32> to vector<2x32xf32>
    %153 = vector.shape_cast %145 : vector<2x32xf32> to vector<1x2x32xf32>
    tpu.vector_store %arg11[%150, %c0_45, %c0_46], %153 {strides = array<i32>} : memref<8x2x32xf32, #tpu.memory_space<vmem>>, vector<1x2x32xf32>,
    %c2_i32 = arith.constant 2 : i32
    %c7_i32_47 = arith.constant 7 : i32
    %154 = arith.subi %c7_i32_47, %c2_i32 : i32
    %155 = arith.index_cast %c2_i32 : i32 to index
    %c0_48 = arith.constant 0 : index
    %c0_49 = arith.constant 0 : index
    %156 = vector.load %arg9[%155, %c0_48, %c0_49] : memref<8x2x256xf32, #tpu.memory_space<vmem>>, vector<1x2x256xf32>
    %157 = vector.shape_cast %156 : vector<1x2x256xf32> to vector<2x256xf32>
    %158 = vector.extract_strided_slice %157 {offsets = [0, 0], sizes = [2, 128], strides = [1, 1]} : vector<2x256xf32> to vector<2x128xf32>
    %cst_50 = arith.constant dense<0.000000e+00> : vector<2x128xf32>
    %159 = tpu.matmul %114, %9, %cst_50 {dimension_numbers = #tpu.dot_dimension_numbers<[1], [0], [0], [1], [0, 0, 1, 1], [], []>} : vector<2x32xf32>, vector<32x128xf32>, vector<2x128xf32> -> vector<2x128xf32>
    %160 = arith.addf %158, %159 : vector<2x128xf32>
    %161 = vector.extract_strided_slice %160 {offsets = [0, 0], sizes = [2, 32], strides = [1, 1]} : vector<2x128xf32> to vector<2x32xf32>
    %162 = arith.negf %161 : vector<2x32xf32>
    %163 = math.exp %162 : vector<2x32xf32>
    %cst_51 = arith.constant 1.000000e+00 : f32
    %164 = vector.broadcast %cst_51 : f32 to vector<2x32xf32>
    %165 = arith.addf %164, %163 : vector<2x32xf32>
    %166 = arith.divf %164, %165 : vector<2x32xf32>
    %167 = vector.extract_strided_slice %160 {offsets = [0, 32], sizes = [2, 32], strides = [1, 1]} : vector<2x128xf32> to vector<2x32xf32>
    %168 = arith.negf %167 : vector<2x32xf32>
    %169 = math.exp %168 : vector<2x32xf32>
    %cst_52 = arith.constant 1.000000e+00 : f32
    %170 = vector.broadcast %cst_52 : f32 to vector<2x32xf32>
    %171 = arith.addf %170, %169 : vector<2x32xf32>
    %172 = arith.divf %170, %171 : vector<2x32xf32>
    %173 = vector.extract_strided_slice %160 {offsets = [0, 64], sizes = [2, 32], strides = [1, 1]} : vector<2x128xf32> to vector<2x32xf32>
    %174 = math.tanh %173 : vector<2x32xf32>
    %175 = vector.extract_strided_slice %160 {offsets = [0, 96], sizes = [2, 32], strides = [1, 1]} : vector<2x128xf32> to vector<2x32xf32>
    %176 = arith.negf %175 : vector<2x32xf32>
    %177 = math.exp %176 : vector<2x32xf32>
    %cst_53 = arith.constant 1.000000e+00 : f32
    %178 = vector.broadcast %cst_53 : f32 to vector<2x32xf32>
    %179 = arith.addf %178, %177 : vector<2x32xf32>
    %180 = arith.divf %178, %179 : vector<2x32xf32>
    %181 = arith.mulf %172, %112 : vector<2x32xf32>
    %182 = arith.mulf %166, %174 : vector<2x32xf32>
    %183 = arith.addf %181, %182 : vector<2x32xf32>
    %184 = math.tanh %183 : vector<2x32xf32>
    %185 = arith.mulf %180, %184 : vector<2x32xf32>
    %186 = arith.index_cast %154 : i32 to index
    %c0_54 = arith.constant 0 : index
    %c0_55 = arith.constant 0 : index
    %187 = vector.load %arg9[%186, %c0_54, %c0_55] : memref<8x2x256xf32, #tpu.memory_space<vmem>>, vector<1x2x256xf32>
    %188 = vector.shape_cast %187 : vector<1x2x256xf32> to vector<2x256xf32>
    %189 = vector.extract_strided_slice %188 {offsets = [0, 128], sizes = [2, 128], strides = [1, 1]} : vector<2x256xf32> to vector<2x128xf32>
    %cst_56 = arith.constant dense<0.000000e+00> : vector<2x128xf32>
    %190 = tpu.matmul %145, %10, %cst_56 {dimension_numbers = #tpu.dot_dimension_numbers<[1], [0], [0], [1], [0, 0, 1, 1], [], []>} : vector<2x32xf32>, vector<32x128xf32>, vector<2x128xf32> -> vector<2x128xf32>
    %191 = arith.addf %189, %190 : vector<2x128xf32>
    %192 = vector.extract_strided_slice %191 {offsets = [0, 0], sizes = [2, 32], strides = [1, 1]} : vector<2x128xf32> to vector<2x32xf32>
    %193 = arith.negf %192 : vector<2x32xf32>
    %194 = math.exp %193 : vector<2x32xf32>
    %cst_57 = arith.constant 1.000000e+00 : f32
    %195 = vector.broadcast %cst_57 : f32 to vector<2x32xf32>
    %196 = arith.addf %195, %194 : vector<2x32xf32>
    %197 = arith.divf %195, %196 : vector<2x32xf32>
    %198 = vector.extract_strided_slice %191 {offsets = [0, 32], sizes = [2, 32], strides = [1, 1]} : vector<2x128xf32> to vector<2x32xf32>
    %199 = arith.negf %198 : vector<2x32xf32>
    %200 = math.exp %199 : vector<2x32xf32>
    %cst_58 = arith.constant 1.000000e+00 : f32
    %201 = vector.broadcast %cst_58 : f32 to vector<2x32xf32>
    %202 = arith.addf %201, %200 : vector<2x32xf32>
    %203 = arith.divf %201, %202 : vector<2x32xf32>
    %204 = vector.extract_strided_slice %191 {offsets = [0, 64], sizes = [2, 32], strides = [1, 1]} : vector<2x128xf32> to vector<2x32xf32>
    %205 = math.tanh %204 : vector<2x32xf32>
    %206 = vector.extract_strided_slice %191 {offsets = [0, 96], sizes = [2, 32], strides = [1, 1]} : vector<2x128xf32> to vector<2x32xf32>
    %207 = arith.negf %206 : vector<2x32xf32>
    %208 = math.exp %207 : vector<2x32xf32>
    %cst_59 = arith.constant 1.000000e+00 : f32
    %209 = vector.broadcast %cst_59 : f32 to vector<2x32xf32>
    %210 = arith.addf %209, %208 : vector<2x32xf32>
    %211 = arith.divf %209, %210 : vector<2x32xf32>
    %212 = arith.mulf %203, %143 : vector<2x32xf32>
    %213 = arith.mulf %197, %205 : vector<2x32xf32>
    %214 = arith.addf %212, %213 : vector<2x32xf32>
    %215 = math.tanh %214 : vector<2x32xf32>
    %216 = arith.mulf %211, %215 : vector<2x32xf32>
    %217 = arith.index_cast %c2_i32 : i32 to index
    %c0_60 = arith.constant 0 : index
    %c0_61 = arith.constant 0 : index
    %218 = vector.load %arg10[%217, %c0_60, %c0_61] : memref<8x2x32xf32, #tpu.memory_space<vmem>>, vector<1x2x32xf32>
    %219 = vector.shape_cast %218 : vector<1x2x32xf32> to vector<2x32xf32>
    %220 = vector.shape_cast %185 : vector<2x32xf32> to vector<1x2x32xf32>
    tpu.vector_store %arg10[%217, %c0_60, %c0_61], %220 {strides = array<i32>} : memref<8x2x32xf32, #tpu.memory_space<vmem>>, vector<1x2x32xf32>,
    %221 = arith.index_cast %154 : i32 to index
    %c0_62 = arith.constant 0 : index
    %c0_63 = arith.constant 0 : index
    %222 = vector.load %arg11[%221, %c0_62, %c0_63] : memref<8x2x32xf32, #tpu.memory_space<vmem>>, vector<1x2x32xf32>
    %223 = vector.shape_cast %222 : vector<1x2x32xf32> to vector<2x32xf32>
    %224 = vector.shape_cast %216 : vector<2x32xf32> to vector<1x2x32xf32>
    tpu.vector_store %arg11[%221, %c0_62, %c0_63], %224 {strides = array<i32>} : memref<8x2x32xf32, #tpu.memory_space<vmem>>, vector<1x2x32xf32>,
    %c3_i32 = arith.constant 3 : i32
    %c7_i32_64 = arith.constant 7 : i32
    %225 = arith.subi %c7_i32_64, %c3_i32 : i32
    %226 = arith.index_cast %c3_i32 : i32 to index
    %c0_65 = arith.constant 0 : index
    %c0_66 = arith.constant 0 : index
    %227 = vector.load %arg9[%226, %c0_65, %c0_66] : memref<8x2x256xf32, #tpu.memory_space<vmem>>, vector<1x2x256xf32>
    %228 = vector.shape_cast %227 : vector<1x2x256xf32> to vector<2x256xf32>
    %229 = vector.extract_strided_slice %228 {offsets = [0, 0], sizes = [2, 128], strides = [1, 1]} : vector<2x256xf32> to vector<2x128xf32>
    %cst_67 = arith.constant dense<0.000000e+00> : vector<2x128xf32>
    %230 = tpu.matmul %185, %9, %cst_67 {dimension_numbers = #tpu.dot_dimension_numbers<[1], [0], [0], [1], [0, 0, 1, 1], [], []>} : vector<2x32xf32>, vector<32x128xf32>, vector<2x128xf32> -> vector<2x128xf32>
    %231 = arith.addf %229, %230 : vector<2x128xf32>
    %232 = vector.extract_strided_slice %231 {offsets = [0, 0], sizes = [2, 32], strides = [1, 1]} : vector<2x128xf32> to vector<2x32xf32>
    %233 = arith.negf %232 : vector<2x32xf32>
    %234 = math.exp %233 : vector<2x32xf32>
    %cst_68 = arith.constant 1.000000e+00 : f32
    %235 = vector.broadcast %cst_68 : f32 to vector<2x32xf32>
    %236 = arith.addf %235, %234 : vector<2x32xf32>
    %237 = arith.divf %235, %236 : vector<2x32xf32>
    %238 = vector.extract_strided_slice %231 {offsets = [0, 32], sizes = [2, 32], strides = [1, 1]} : vector<2x128xf32> to vector<2x32xf32>
    %239 = arith.negf %238 : vector<2x32xf32>
    %240 = math.exp %239 : vector<2x32xf32>
    %cst_69 = arith.constant 1.000000e+00 : f32
    %241 = vector.broadcast %cst_69 : f32 to vector<2x32xf32>
    %242 = arith.addf %241, %240 : vector<2x32xf32>
    %243 = arith.divf %241, %242 : vector<2x32xf32>
    %244 = vector.extract_strided_slice %231 {offsets = [0, 64], sizes = [2, 32], strides = [1, 1]} : vector<2x128xf32> to vector<2x32xf32>
    %245 = math.tanh %244 : vector<2x32xf32>
    %246 = vector.extract_strided_slice %231 {offsets = [0, 96], sizes = [2, 32], strides = [1, 1]} : vector<2x128xf32> to vector<2x32xf32>
    %247 = arith.negf %246 : vector<2x32xf32>
    %248 = math.exp %247 : vector<2x32xf32>
    %cst_70 = arith.constant 1.000000e+00 : f32
    %249 = vector.broadcast %cst_70 : f32 to vector<2x32xf32>
    %250 = arith.addf %249, %248 : vector<2x32xf32>
    %251 = arith.divf %249, %250 : vector<2x32xf32>
    %252 = arith.mulf %243, %183 : vector<2x32xf32>
    %253 = arith.mulf %237, %245 : vector<2x32xf32>
    %254 = arith.addf %252, %253 : vector<2x32xf32>
    %255 = math.tanh %254 : vector<2x32xf32>
    %256 = arith.mulf %251, %255 : vector<2x32xf32>
    %257 = arith.index_cast %225 : i32 to index
    %c0_71 = arith.constant 0 : index
    %c0_72 = arith.constant 0 : index
    %258 = vector.load %arg9[%257, %c0_71, %c0_72] : memref<8x2x256xf32, #tpu.memory_space<vmem>>, vector<1x2x256xf32>
    %259 = vector.shape_cast %258 : vector<1x2x256xf32> to vector<2x256xf32>
    %260 = vector.extract_strided_slice %259 {offsets = [0, 128], sizes = [2, 128], strides = [1, 1]} : vector<2x256xf32> to vector<2x128xf32>
    %cst_73 = arith.constant dense<0.000000e+00> : vector<2x128xf32>
    %261 = tpu.matmul %216, %10, %cst_73 {dimension_numbers = #tpu.dot_dimension_numbers<[1], [0], [0], [1], [0, 0, 1, 1], [], []>} : vector<2x32xf32>, vector<32x128xf32>, vector<2x128xf32> -> vector<2x128xf32>
    %262 = arith.addf %260, %261 : vector<2x128xf32>
    %263 = vector.extract_strided_slice %262 {offsets = [0, 0], sizes = [2, 32], strides = [1, 1]} : vector<2x128xf32> to vector<2x32xf32>
    %264 = arith.negf %263 : vector<2x32xf32>
    %265 = math.exp %264 : vector<2x32xf32>
    %cst_74 = arith.constant 1.000000e+00 : f32
    %266 = vector.broadcast %cst_74 : f32 to vector<2x32xf32>
    %267 = arith.addf %266, %265 : vector<2x32xf32>
    %268 = arith.divf %266, %267 : vector<2x32xf32>
    %269 = vector.extract_strided_slice %262 {offsets = [0, 32], sizes = [2, 32], strides = [1, 1]} : vector<2x128xf32> to vector<2x32xf32>
    %270 = arith.negf %269 : vector<2x32xf32>
    %271 = math.exp %270 : vector<2x32xf32>
    %cst_75 = arith.constant 1.000000e+00 : f32
    %272 = vector.broadcast %cst_75 : f32 to vector<2x32xf32>
    %273 = arith.addf %272, %271 : vector<2x32xf32>
    %274 = arith.divf %272, %273 : vector<2x32xf32>
    %275 = vector.extract_strided_slice %262 {offsets = [0, 64], sizes = [2, 32], strides = [1, 1]} : vector<2x128xf32> to vector<2x32xf32>
    %276 = math.tanh %275 : vector<2x32xf32>
    %277 = vector.extract_strided_slice %262 {offsets = [0, 96], sizes = [2, 32], strides = [1, 1]} : vector<2x128xf32> to vector<2x32xf32>
    %278 = arith.negf %277 : vector<2x32xf32>
    %279 = math.exp %278 : vector<2x32xf32>
    %cst_76 = arith.constant 1.000000e+00 : f32
    %280 = vector.broadcast %cst_76 : f32 to vector<2x32xf32>
    %281 = arith.addf %280, %279 : vector<2x32xf32>
    %282 = arith.divf %280, %281 : vector<2x32xf32>
    %283 = arith.mulf %274, %214 : vector<2x32xf32>
    %284 = arith.mulf %268, %276 : vector<2x32xf32>
    %285 = arith.addf %283, %284 : vector<2x32xf32>
    %286 = math.tanh %285 : vector<2x32xf32>
    %287 = arith.mulf %282, %286 : vector<2x32xf32>
    %288 = arith.index_cast %c3_i32 : i32 to index
    %c0_77 = arith.constant 0 : index
    %c0_78 = arith.constant 0 : index
    %289 = vector.load %arg10[%288, %c0_77, %c0_78] : memref<8x2x32xf32, #tpu.memory_space<vmem>>, vector<1x2x32xf32>
    %290 = vector.shape_cast %289 : vector<1x2x32xf32> to vector<2x32xf32>
    %291 = vector.shape_cast %256 : vector<2x32xf32> to vector<1x2x32xf32>
    tpu.vector_store %arg10[%288, %c0_77, %c0_78], %291 {strides = array<i32>} : memref<8x2x32xf32, #tpu.memory_space<vmem>>, vector<1x2x32xf32>,
    %292 = arith.index_cast %225 : i32 to index
    %c0_79 = arith.constant 0 : index
    %c0_80 = arith.constant 0 : index
    %293 = vector.load %arg11[%292, %c0_79, %c0_80] : memref<8x2x32xf32, #tpu.memory_space<vmem>>, vector<1x2x32xf32>
    %294 = vector.shape_cast %293 : vector<1x2x32xf32> to vector<2x32xf32>
    %295 = vector.shape_cast %287 : vector<2x32xf32> to vector<1x2x32xf32>
    tpu.vector_store %arg11[%292, %c0_79, %c0_80], %295 {strides = array<i32>} : memref<8x2x32xf32, #tpu.memory_space<vmem>>, vector<1x2x32xf32>,
    %c4_i32 = arith.constant 4 : i32
    %c7_i32_81 = arith.constant 7 : i32
    %296 = arith.subi %c7_i32_81, %c4_i32 : i32
    %297 = arith.index_cast %c4_i32 : i32 to index
    %c0_82 = arith.constant 0 : index
    %c0_83 = arith.constant 0 : index
    %298 = vector.load %arg9[%297, %c0_82, %c0_83] : memref<8x2x256xf32, #tpu.memory_space<vmem>>, vector<1x2x256xf32>
    %299 = vector.shape_cast %298 : vector<1x2x256xf32> to vector<2x256xf32>
    %300 = vector.extract_strided_slice %299 {offsets = [0, 0], sizes = [2, 128], strides = [1, 1]} : vector<2x256xf32> to vector<2x128xf32>
    %cst_84 = arith.constant dense<0.000000e+00> : vector<2x128xf32>
    %301 = tpu.matmul %256, %9, %cst_84 {dimension_numbers = #tpu.dot_dimension_numbers<[1], [0], [0], [1], [0, 0, 1, 1], [], []>} : vector<2x32xf32>, vector<32x128xf32>, vector<2x128xf32> -> vector<2x128xf32>
    %302 = arith.addf %300, %301 : vector<2x128xf32>
    %303 = vector.extract_strided_slice %302 {offsets = [0, 0], sizes = [2, 32], strides = [1, 1]} : vector<2x128xf32> to vector<2x32xf32>
    %304 = arith.negf %303 : vector<2x32xf32>
    %305 = math.exp %304 : vector<2x32xf32>
    %cst_85 = arith.constant 1.000000e+00 : f32
    %306 = vector.broadcast %cst_85 : f32 to vector<2x32xf32>
    %307 = arith.addf %306, %305 : vector<2x32xf32>
    %308 = arith.divf %306, %307 : vector<2x32xf32>
    %309 = vector.extract_strided_slice %302 {offsets = [0, 32], sizes = [2, 32], strides = [1, 1]} : vector<2x128xf32> to vector<2x32xf32>
    %310 = arith.negf %309 : vector<2x32xf32>
    %311 = math.exp %310 : vector<2x32xf32>
    %cst_86 = arith.constant 1.000000e+00 : f32
    %312 = vector.broadcast %cst_86 : f32 to vector<2x32xf32>
    %313 = arith.addf %312, %311 : vector<2x32xf32>
    %314 = arith.divf %312, %313 : vector<2x32xf32>
    %315 = vector.extract_strided_slice %302 {offsets = [0, 64], sizes = [2, 32], strides = [1, 1]} : vector<2x128xf32> to vector<2x32xf32>
    %316 = math.tanh %315 : vector<2x32xf32>
    %317 = vector.extract_strided_slice %302 {offsets = [0, 96], sizes = [2, 32], strides = [1, 1]} : vector<2x128xf32> to vector<2x32xf32>
    %318 = arith.negf %317 : vector<2x32xf32>
    %319 = math.exp %318 : vector<2x32xf32>
    %cst_87 = arith.constant 1.000000e+00 : f32
    %320 = vector.broadcast %cst_87 : f32 to vector<2x32xf32>
    %321 = arith.addf %320, %319 : vector<2x32xf32>
    %322 = arith.divf %320, %321 : vector<2x32xf32>
    %323 = arith.mulf %314, %254 : vector<2x32xf32>
    %324 = arith.mulf %308, %316 : vector<2x32xf32>
    %325 = arith.addf %323, %324 : vector<2x32xf32>
    %326 = math.tanh %325 : vector<2x32xf32>
    %327 = arith.mulf %322, %326 : vector<2x32xf32>
    %328 = arith.index_cast %296 : i32 to index
    %c0_88 = arith.constant 0 : index
    %c0_89 = arith.constant 0 : index
    %329 = vector.load %arg9[%328, %c0_88, %c0_89] : memref<8x2x256xf32, #tpu.memory_space<vmem>>, vector<1x2x256xf32>
    %330 = vector.shape_cast %329 : vector<1x2x256xf32> to vector<2x256xf32>
    %331 = vector.extract_strided_slice %330 {offsets = [0, 128], sizes = [2, 128], strides = [1, 1]} : vector<2x256xf32> to vector<2x128xf32>
    %cst_90 = arith.constant dense<0.000000e+00> : vector<2x128xf32>
    %332 = tpu.matmul %287, %10, %cst_90 {dimension_numbers = #tpu.dot_dimension_numbers<[1], [0], [0], [1], [0, 0, 1, 1], [], []>} : vector<2x32xf32>, vector<32x128xf32>, vector<2x128xf32> -> vector<2x128xf32>
    %333 = arith.addf %331, %332 : vector<2x128xf32>
    %334 = vector.extract_strided_slice %333 {offsets = [0, 0], sizes = [2, 32], strides = [1, 1]} : vector<2x128xf32> to vector<2x32xf32>
    %335 = arith.negf %334 : vector<2x32xf32>
    %336 = math.exp %335 : vector<2x32xf32>
    %cst_91 = arith.constant 1.000000e+00 : f32
    %337 = vector.broadcast %cst_91 : f32 to vector<2x32xf32>
    %338 = arith.addf %337, %336 : vector<2x32xf32>
    %339 = arith.divf %337, %338 : vector<2x32xf32>
    %340 = vector.extract_strided_slice %333 {offsets = [0, 32], sizes = [2, 32], strides = [1, 1]} : vector<2x128xf32> to vector<2x32xf32>
    %341 = arith.negf %340 : vector<2x32xf32>
    %342 = math.exp %341 : vector<2x32xf32>
    %cst_92 = arith.constant 1.000000e+00 : f32
    %343 = vector.broadcast %cst_92 : f32 to vector<2x32xf32>
    %344 = arith.addf %343, %342 : vector<2x32xf32>
    %345 = arith.divf %343, %344 : vector<2x32xf32>
    %346 = vector.extract_strided_slice %333 {offsets = [0, 64], sizes = [2, 32], strides = [1, 1]} : vector<2x128xf32> to vector<2x32xf32>
    %347 = math.tanh %346 : vector<2x32xf32>
    %348 = vector.extract_strided_slice %333 {offsets = [0, 96], sizes = [2, 32], strides = [1, 1]} : vector<2x128xf32> to vector<2x32xf32>
    %349 = arith.negf %348 : vector<2x32xf32>
    %350 = math.exp %349 : vector<2x32xf32>
    %cst_93 = arith.constant 1.000000e+00 : f32
    %351 = vector.broadcast %cst_93 : f32 to vector<2x32xf32>
    %352 = arith.addf %351, %350 : vector<2x32xf32>
    %353 = arith.divf %351, %352 : vector<2x32xf32>
    %354 = arith.mulf %345, %285 : vector<2x32xf32>
    %355 = arith.mulf %339, %347 : vector<2x32xf32>
    %356 = arith.addf %354, %355 : vector<2x32xf32>
    %357 = math.tanh %356 : vector<2x32xf32>
    %358 = arith.mulf %353, %357 : vector<2x32xf32>
    %359 = arith.index_cast %c4_i32 : i32 to index
    %c0_94 = arith.constant 0 : index
    %c0_95 = arith.constant 0 : index
    %360 = vector.load %arg10[%359, %c0_94, %c0_95] : memref<8x2x32xf32, #tpu.memory_space<vmem>>, vector<1x2x32xf32>
    %361 = vector.shape_cast %360 : vector<1x2x32xf32> to vector<2x32xf32>
    %362 = vector.shape_cast %327 : vector<2x32xf32> to vector<1x2x32xf32>
    tpu.vector_store %arg10[%359, %c0_94, %c0_95], %362 {strides = array<i32>} : memref<8x2x32xf32, #tpu.memory_space<vmem>>, vector<1x2x32xf32>,
    %363 = arith.index_cast %296 : i32 to index
    %c0_96 = arith.constant 0 : index
    %c0_97 = arith.constant 0 : index
    %364 = vector.load %arg11[%363, %c0_96, %c0_97] : memref<8x2x32xf32, #tpu.memory_space<vmem>>, vector<1x2x32xf32>
    %365 = vector.shape_cast %364 : vector<1x2x32xf32> to vector<2x32xf32>
    %366 = vector.shape_cast %358 : vector<2x32xf32> to vector<1x2x32xf32>
    tpu.vector_store %arg11[%363, %c0_96, %c0_97], %366 {strides = array<i32>} : memref<8x2x32xf32, #tpu.memory_space<vmem>>, vector<1x2x32xf32>,
    %c5_i32 = arith.constant 5 : i32
    %c7_i32_98 = arith.constant 7 : i32
    %367 = arith.subi %c7_i32_98, %c5_i32 : i32
    %368 = arith.index_cast %c5_i32 : i32 to index
    %c0_99 = arith.constant 0 : index
    %c0_100 = arith.constant 0 : index
    %369 = vector.load %arg9[%368, %c0_99, %c0_100] : memref<8x2x256xf32, #tpu.memory_space<vmem>>, vector<1x2x256xf32>
    %370 = vector.shape_cast %369 : vector<1x2x256xf32> to vector<2x256xf32>
    %371 = vector.extract_strided_slice %370 {offsets = [0, 0], sizes = [2, 128], strides = [1, 1]} : vector<2x256xf32> to vector<2x128xf32>
    %cst_101 = arith.constant dense<0.000000e+00> : vector<2x128xf32>
    %372 = tpu.matmul %327, %9, %cst_101 {dimension_numbers = #tpu.dot_dimension_numbers<[1], [0], [0], [1], [0, 0, 1, 1], [], []>} : vector<2x32xf32>, vector<32x128xf32>, vector<2x128xf32> -> vector<2x128xf32>
    %373 = arith.addf %371, %372 : vector<2x128xf32>
    %374 = vector.extract_strided_slice %373 {offsets = [0, 0], sizes = [2, 32], strides = [1, 1]} : vector<2x128xf32> to vector<2x32xf32>
    %375 = arith.negf %374 : vector<2x32xf32>
    %376 = math.exp %375 : vector<2x32xf32>
    %cst_102 = arith.constant 1.000000e+00 : f32
    %377 = vector.broadcast %cst_102 : f32 to vector<2x32xf32>
    %378 = arith.addf %377, %376 : vector<2x32xf32>
    %379 = arith.divf %377, %378 : vector<2x32xf32>
    %380 = vector.extract_strided_slice %373 {offsets = [0, 32], sizes = [2, 32], strides = [1, 1]} : vector<2x128xf32> to vector<2x32xf32>
    %381 = arith.negf %380 : vector<2x32xf32>
    %382 = math.exp %381 : vector<2x32xf32>
    %cst_103 = arith.constant 1.000000e+00 : f32
    %383 = vector.broadcast %cst_103 : f32 to vector<2x32xf32>
    %384 = arith.addf %383, %382 : vector<2x32xf32>
    %385 = arith.divf %383, %384 : vector<2x32xf32>
    %386 = vector.extract_strided_slice %373 {offsets = [0, 64], sizes = [2, 32], strides = [1, 1]} : vector<2x128xf32> to vector<2x32xf32>
    %387 = math.tanh %386 : vector<2x32xf32>
    %388 = vector.extract_strided_slice %373 {offsets = [0, 96], sizes = [2, 32], strides = [1, 1]} : vector<2x128xf32> to vector<2x32xf32>
    %389 = arith.negf %388 : vector<2x32xf32>
    %390 = math.exp %389 : vector<2x32xf32>
    %cst_104 = arith.constant 1.000000e+00 : f32
    %391 = vector.broadcast %cst_104 : f32 to vector<2x32xf32>
    %392 = arith.addf %391, %390 : vector<2x32xf32>
    %393 = arith.divf %391, %392 : vector<2x32xf32>
    %394 = arith.mulf %385, %325 : vector<2x32xf32>
    %395 = arith.mulf %379, %387 : vector<2x32xf32>
    %396 = arith.addf %394, %395 : vector<2x32xf32>
    %397 = math.tanh %396 : vector<2x32xf32>
    %398 = arith.mulf %393, %397 : vector<2x32xf32>
    %399 = arith.index_cast %367 : i32 to index
    %c0_105 = arith.constant 0 : index
    %c0_106 = arith.constant 0 : index
    %400 = vector.load %arg9[%399, %c0_105, %c0_106] : memref<8x2x256xf32, #tpu.memory_space<vmem>>, vector<1x2x256xf32>
    %401 = vector.shape_cast %400 : vector<1x2x256xf32> to vector<2x256xf32>
    %402 = vector.extract_strided_slice %401 {offsets = [0, 128], sizes = [2, 128], strides = [1, 1]} : vector<2x256xf32> to vector<2x128xf32>
    %cst_107 = arith.constant dense<0.000000e+00> : vector<2x128xf32>
    %403 = tpu.matmul %358, %10, %cst_107 {dimension_numbers = #tpu.dot_dimension_numbers<[1], [0], [0], [1], [0, 0, 1, 1], [], []>} : vector<2x32xf32>, vector<32x128xf32>, vector<2x128xf32> -> vector<2x128xf32>
    %404 = arith.addf %402, %403 : vector<2x128xf32>
    %405 = vector.extract_strided_slice %404 {offsets = [0, 0], sizes = [2, 32], strides = [1, 1]} : vector<2x128xf32> to vector<2x32xf32>
    %406 = arith.negf %405 : vector<2x32xf32>
    %407 = math.exp %406 : vector<2x32xf32>
    %cst_108 = arith.constant 1.000000e+00 : f32
    %408 = vector.broadcast %cst_108 : f32 to vector<2x32xf32>
    %409 = arith.addf %408, %407 : vector<2x32xf32>
    %410 = arith.divf %408, %409 : vector<2x32xf32>
    %411 = vector.extract_strided_slice %404 {offsets = [0, 32], sizes = [2, 32], strides = [1, 1]} : vector<2x128xf32> to vector<2x32xf32>
    %412 = arith.negf %411 : vector<2x32xf32>
    %413 = math.exp %412 : vector<2x32xf32>
    %cst_109 = arith.constant 1.000000e+00 : f32
    %414 = vector.broadcast %cst_109 : f32 to vector<2x32xf32>
    %415 = arith.addf %414, %413 : vector<2x32xf32>
    %416 = arith.divf %414, %415 : vector<2x32xf32>
    %417 = vector.extract_strided_slice %404 {offsets = [0, 64], sizes = [2, 32], strides = [1, 1]} : vector<2x128xf32> to vector<2x32xf32>
    %418 = math.tanh %417 : vector<2x32xf32>
    %419 = vector.extract_strided_slice %404 {offsets = [0, 96], sizes = [2, 32], strides = [1, 1]} : vector<2x128xf32> to vector<2x32xf32>
    %420 = arith.negf %419 : vector<2x32xf32>
    %421 = math.exp %420 : vector<2x32xf32>
    %cst_110 = arith.constant 1.000000e+00 : f32
    %422 = vector.broadcast %cst_110 : f32 to vector<2x32xf32>
    %423 = arith.addf %422, %421 : vector<2x32xf32>
    %424 = arith.divf %422, %423 : vector<2x32xf32>
    %425 = arith.mulf %416, %356 : vector<2x32xf32>
    %426 = arith.mulf %410, %418 : vector<2x32xf32>
    %427 = arith.addf %425, %426 : vector<2x32xf32>
    %428 = math.tanh %427 : vector<2x32xf32>
    %429 = arith.mulf %424, %428 : vector<2x32xf32>
    %430 = arith.index_cast %c5_i32 : i32 to index
    %c0_111 = arith.constant 0 : index
    %c0_112 = arith.constant 0 : index
    %431 = vector.load %arg10[%430, %c0_111, %c0_112] : memref<8x2x32xf32, #tpu.memory_space<vmem>>, vector<1x2x32xf32>
    %432 = vector.shape_cast %431 : vector<1x2x32xf32> to vector<2x32xf32>
    %433 = vector.shape_cast %398 : vector<2x32xf32> to vector<1x2x32xf32>
    tpu.vector_store %arg10[%430, %c0_111, %c0_112], %433 {strides = array<i32>} : memref<8x2x32xf32, #tpu.memory_space<vmem>>, vector<1x2x32xf32>,
    %434 = arith.index_cast %367 : i32 to index
    %c0_113 = arith.constant 0 : index
    %c0_114 = arith.constant 0 : index
    %435 = vector.load %arg11[%434, %c0_113, %c0_114] : memref<8x2x32xf32, #tpu.memory_space<vmem>>, vector<1x2x32xf32>
    %436 = vector.shape_cast %435 : vector<1x2x32xf32> to vector<2x32xf32>
    %437 = vector.shape_cast %429 : vector<2x32xf32> to vector<1x2x32xf32>
    tpu.vector_store %arg11[%434, %c0_113, %c0_114], %437 {strides = array<i32>} : memref<8x2x32xf32, #tpu.memory_space<vmem>>, vector<1x2x32xf32>,
    %c6_i32 = arith.constant 6 : i32
    %c7_i32_115 = arith.constant 7 : i32
    %438 = arith.subi %c7_i32_115, %c6_i32 : i32
    %439 = arith.index_cast %c6_i32 : i32 to index
    %c0_116 = arith.constant 0 : index
    %c0_117 = arith.constant 0 : index
    %440 = vector.load %arg9[%439, %c0_116, %c0_117] : memref<8x2x256xf32, #tpu.memory_space<vmem>>, vector<1x2x256xf32>
    %441 = vector.shape_cast %440 : vector<1x2x256xf32> to vector<2x256xf32>
    %442 = vector.extract_strided_slice %441 {offsets = [0, 0], sizes = [2, 128], strides = [1, 1]} : vector<2x256xf32> to vector<2x128xf32>
    %cst_118 = arith.constant dense<0.000000e+00> : vector<2x128xf32>
    %443 = tpu.matmul %398, %9, %cst_118 {dimension_numbers = #tpu.dot_dimension_numbers<[1], [0], [0], [1], [0, 0, 1, 1], [], []>} : vector<2x32xf32>, vector<32x128xf32>, vector<2x128xf32> -> vector<2x128xf32>
    %444 = arith.addf %442, %443 : vector<2x128xf32>
    %445 = vector.extract_strided_slice %444 {offsets = [0, 0], sizes = [2, 32], strides = [1, 1]} : vector<2x128xf32> to vector<2x32xf32>
    %446 = arith.negf %445 : vector<2x32xf32>
    %447 = math.exp %446 : vector<2x32xf32>
    %cst_119 = arith.constant 1.000000e+00 : f32
    %448 = vector.broadcast %cst_119 : f32 to vector<2x32xf32>
    %449 = arith.addf %448, %447 : vector<2x32xf32>
    %450 = arith.divf %448, %449 : vector<2x32xf32>
    %451 = vector.extract_strided_slice %444 {offsets = [0, 32], sizes = [2, 32], strides = [1, 1]} : vector<2x128xf32> to vector<2x32xf32>
    %452 = arith.negf %451 : vector<2x32xf32>
    %453 = math.exp %452 : vector<2x32xf32>
    %cst_120 = arith.constant 1.000000e+00 : f32
    %454 = vector.broadcast %cst_120 : f32 to vector<2x32xf32>
    %455 = arith.addf %454, %453 : vector<2x32xf32>
    %456 = arith.divf %454, %455 : vector<2x32xf32>
    %457 = vector.extract_strided_slice %444 {offsets = [0, 64], sizes = [2, 32], strides = [1, 1]} : vector<2x128xf32> to vector<2x32xf32>
    %458 = math.tanh %457 : vector<2x32xf32>
    %459 = vector.extract_strided_slice %444 {offsets = [0, 96], sizes = [2, 32], strides = [1, 1]} : vector<2x128xf32> to vector<2x32xf32>
    %460 = arith.negf %459 : vector<2x32xf32>
    %461 = math.exp %460 : vector<2x32xf32>
    %cst_121 = arith.constant 1.000000e+00 : f32
    %462 = vector.broadcast %cst_121 : f32 to vector<2x32xf32>
    %463 = arith.addf %462, %461 : vector<2x32xf32>
    %464 = arith.divf %462, %463 : vector<2x32xf32>
    %465 = arith.mulf %456, %396 : vector<2x32xf32>
    %466 = arith.mulf %450, %458 : vector<2x32xf32>
    %467 = arith.addf %465, %466 : vector<2x32xf32>
    %468 = math.tanh %467 : vector<2x32xf32>
    %469 = arith.mulf %464, %468 : vector<2x32xf32>
    %470 = arith.index_cast %438 : i32 to index
    %c0_122 = arith.constant 0 : index
    %c0_123 = arith.constant 0 : index
    %471 = vector.load %arg9[%470, %c0_122, %c0_123] : memref<8x2x256xf32, #tpu.memory_space<vmem>>, vector<1x2x256xf32>
    %472 = vector.shape_cast %471 : vector<1x2x256xf32> to vector<2x256xf32>
    %473 = vector.extract_strided_slice %472 {offsets = [0, 128], sizes = [2, 128], strides = [1, 1]} : vector<2x256xf32> to vector<2x128xf32>
    %cst_124 = arith.constant dense<0.000000e+00> : vector<2x128xf32>
    %474 = tpu.matmul %429, %10, %cst_124 {dimension_numbers = #tpu.dot_dimension_numbers<[1], [0], [0], [1], [0, 0, 1, 1], [], []>} : vector<2x32xf32>, vector<32x128xf32>, vector<2x128xf32> -> vector<2x128xf32>
    %475 = arith.addf %473, %474 : vector<2x128xf32>
    %476 = vector.extract_strided_slice %475 {offsets = [0, 0], sizes = [2, 32], strides = [1, 1]} : vector<2x128xf32> to vector<2x32xf32>
    %477 = arith.negf %476 : vector<2x32xf32>
    %478 = math.exp %477 : vector<2x32xf32>
    %cst_125 = arith.constant 1.000000e+00 : f32
    %479 = vector.broadcast %cst_125 : f32 to vector<2x32xf32>
    %480 = arith.addf %479, %478 : vector<2x32xf32>
    %481 = arith.divf %479, %480 : vector<2x32xf32>
    %482 = vector.extract_strided_slice %475 {offsets = [0, 32], sizes = [2, 32], strides = [1, 1]} : vector<2x128xf32> to vector<2x32xf32>
    %483 = arith.negf %482 : vector<2x32xf32>
    %484 = math.exp %483 : vector<2x32xf32>
    %cst_126 = arith.constant 1.000000e+00 : f32
    %485 = vector.broadcast %cst_126 : f32 to vector<2x32xf32>
    %486 = arith.addf %485, %484 : vector<2x32xf32>
    %487 = arith.divf %485, %486 : vector<2x32xf32>
    %488 = vector.extract_strided_slice %475 {offsets = [0, 64], sizes = [2, 32], strides = [1, 1]} : vector<2x128xf32> to vector<2x32xf32>
    %489 = math.tanh %488 : vector<2x32xf32>
    %490 = vector.extract_strided_slice %475 {offsets = [0, 96], sizes = [2, 32], strides = [1, 1]} : vector<2x128xf32> to vector<2x32xf32>
    %491 = arith.negf %490 : vector<2x32xf32>
    %492 = math.exp %491 : vector<2x32xf32>
    %cst_127 = arith.constant 1.000000e+00 : f32
    %493 = vector.broadcast %cst_127 : f32 to vector<2x32xf32>
    %494 = arith.addf %493, %492 : vector<2x32xf32>
    %495 = arith.divf %493, %494 : vector<2x32xf32>
    %496 = arith.mulf %487, %427 : vector<2x32xf32>
    %497 = arith.mulf %481, %489 : vector<2x32xf32>
    %498 = arith.addf %496, %497 : vector<2x32xf32>
    %499 = math.tanh %498 : vector<2x32xf32>
    %500 = arith.mulf %495, %499 : vector<2x32xf32>
    %501 = arith.index_cast %c6_i32 : i32 to index
    %c0_128 = arith.constant 0 : index
    %c0_129 = arith.constant 0 : index
    %502 = vector.load %arg10[%501, %c0_128, %c0_129] : memref<8x2x32xf32, #tpu.memory_space<vmem>>, vector<1x2x32xf32>
    %503 = vector.shape_cast %502 : vector<1x2x32xf32> to vector<2x32xf32>
    %504 = vector.shape_cast %469 : vector<2x32xf32> to vector<1x2x32xf32>
    tpu.vector_store %arg10[%501, %c0_128, %c0_129], %504 {strides = array<i32>} : memref<8x2x32xf32, #tpu.memory_space<vmem>>, vector<1x2x32xf32>,
    %505 = arith.index_cast %438 : i32 to index
    %c0_130 = arith.constant 0 : index
    %c0_131 = arith.constant 0 : index
    %506 = vector.load %arg11[%505, %c0_130, %c0_131] : memref<8x2x32xf32, #tpu.memory_space<vmem>>, vector<1x2x32xf32>
    %507 = vector.shape_cast %506 : vector<1x2x32xf32> to vector<2x32xf32>
    %508 = vector.shape_cast %500 : vector<2x32xf32> to vector<1x2x32xf32>
    tpu.vector_store %arg11[%505, %c0_130, %c0_131], %508 {strides = array<i32>} : memref<8x2x32xf32, #tpu.memory_space<vmem>>, vector<1x2x32xf32>,
    %c7_i32_132 = arith.constant 7 : i32
    %c7_i32_133 = arith.constant 7 : i32
    %509 = arith.subi %c7_i32_133, %c7_i32_132 : i32
    %510 = arith.index_cast %c7_i32_132 : i32 to index
    %c0_134 = arith.constant 0 : index
    %c0_135 = arith.constant 0 : index
    %511 = vector.load %arg9[%510, %c0_134, %c0_135] : memref<8x2x256xf32, #tpu.memory_space<vmem>>, vector<1x2x256xf32>
    %512 = vector.shape_cast %511 : vector<1x2x256xf32> to vector<2x256xf32>
    %513 = vector.extract_strided_slice %512 {offsets = [0, 0], sizes = [2, 128], strides = [1, 1]} : vector<2x256xf32> to vector<2x128xf32>
    %cst_136 = arith.constant dense<0.000000e+00> : vector<2x128xf32>
    %514 = tpu.matmul %469, %9, %cst_136 {dimension_numbers = #tpu.dot_dimension_numbers<[1], [0], [0], [1], [0, 0, 1, 1], [], []>} : vector<2x32xf32>, vector<32x128xf32>, vector<2x128xf32> -> vector<2x128xf32>
    %515 = arith.addf %513, %514 : vector<2x128xf32>
    %516 = vector.extract_strided_slice %515 {offsets = [0, 0], sizes = [2, 32], strides = [1, 1]} : vector<2x128xf32> to vector<2x32xf32>
    %517 = arith.negf %516 : vector<2x32xf32>
    %518 = math.exp %517 : vector<2x32xf32>
    %cst_137 = arith.constant 1.000000e+00 : f32
    %519 = vector.broadcast %cst_137 : f32 to vector<2x32xf32>
    %520 = arith.addf %519, %518 : vector<2x32xf32>
    %521 = arith.divf %519, %520 : vector<2x32xf32>
    %522 = vector.extract_strided_slice %515 {offsets = [0, 32], sizes = [2, 32], strides = [1, 1]} : vector<2x128xf32> to vector<2x32xf32>
    %523 = arith.negf %522 : vector<2x32xf32>
    %524 = math.exp %523 : vector<2x32xf32>
    %cst_138 = arith.constant 1.000000e+00 : f32
    %525 = vector.broadcast %cst_138 : f32 to vector<2x32xf32>
    %526 = arith.addf %525, %524 : vector<2x32xf32>
    %527 = arith.divf %525, %526 : vector<2x32xf32>
    %528 = vector.extract_strided_slice %515 {offsets = [0, 64], sizes = [2, 32], strides = [1, 1]} : vector<2x128xf32> to vector<2x32xf32>
    %529 = math.tanh %528 : vector<2x32xf32>
    %530 = vector.extract_strided_slice %515 {offsets = [0, 96], sizes = [2, 32], strides = [1, 1]} : vector<2x128xf32> to vector<2x32xf32>
    %531 = arith.negf %530 : vector<2x32xf32>
    %532 = math.exp %531 : vector<2x32xf32>
    %cst_139 = arith.constant 1.000000e+00 : f32
    %533 = vector.broadcast %cst_139 : f32 to vector<2x32xf32>
    %534 = arith.addf %533, %532 : vector<2x32xf32>
    %535 = arith.divf %533, %534 : vector<2x32xf32>
    %536 = arith.mulf %527, %467 : vector<2x32xf32>
    %537 = arith.mulf %521, %529 : vector<2x32xf32>
    %538 = arith.addf %536, %537 : vector<2x32xf32>
    %539 = math.tanh %538 : vector<2x32xf32>
    %540 = arith.mulf %535, %539 : vector<2x32xf32>
    %541 = arith.index_cast %509 : i32 to index
    %c0_140 = arith.constant 0 : index
    %c0_141 = arith.constant 0 : index
    %542 = vector.load %arg9[%541, %c0_140, %c0_141] : memref<8x2x256xf32, #tpu.memory_space<vmem>>, vector<1x2x256xf32>
    %543 = vector.shape_cast %542 : vector<1x2x256xf32> to vector<2x256xf32>
    %544 = vector.extract_strided_slice %543 {offsets = [0, 128], sizes = [2, 128], strides = [1, 1]} : vector<2x256xf32> to vector<2x128xf32>
    %cst_142 = arith.constant dense<0.000000e+00> : vector<2x128xf32>
    %545 = tpu.matmul %500, %10, %cst_142 {dimension_numbers = #tpu.dot_dimension_numbers<[1], [0], [0], [1], [0, 0, 1, 1], [], []>} : vector<2x32xf32>, vector<32x128xf32>, vector<2x128xf32> -> vector<2x128xf32>
    %546 = arith.addf %544, %545 : vector<2x128xf32>
    %547 = vector.extract_strided_slice %546 {offsets = [0, 0], sizes = [2, 32], strides = [1, 1]} : vector<2x128xf32> to vector<2x32xf32>
    %548 = arith.negf %547 : vector<2x32xf32>
    %549 = math.exp %548 : vector<2x32xf32>
    %cst_143 = arith.constant 1.000000e+00 : f32
    %550 = vector.broadcast %cst_143 : f32 to vector<2x32xf32>
    %551 = arith.addf %550, %549 : vector<2x32xf32>
    %552 = arith.divf %550, %551 : vector<2x32xf32>
    %553 = vector.extract_strided_slice %546 {offsets = [0, 32], sizes = [2, 32], strides = [1, 1]} : vector<2x128xf32> to vector<2x32xf32>
    %554 = arith.negf %553 : vector<2x32xf32>
    %555 = math.exp %554 : vector<2x32xf32>
    %cst_144 = arith.constant 1.000000e+00 : f32
    %556 = vector.broadcast %cst_144 : f32 to vector<2x32xf32>
    %557 = arith.addf %556, %555 : vector<2x32xf32>
    %558 = arith.divf %556, %557 : vector<2x32xf32>
    %559 = vector.extract_strided_slice %546 {offsets = [0, 64], sizes = [2, 32], strides = [1, 1]} : vector<2x128xf32> to vector<2x32xf32>
    %560 = math.tanh %559 : vector<2x32xf32>
    %561 = vector.extract_strided_slice %546 {offsets = [0, 96], sizes = [2, 32], strides = [1, 1]} : vector<2x128xf32> to vector<2x32xf32>
    %562 = arith.negf %561 : vector<2x32xf32>
    %563 = math.exp %562 : vector<2x32xf32>
    %cst_145 = arith.constant 1.000000e+00 : f32
    %564 = vector.broadcast %cst_145 : f32 to vector<2x32xf32>
    %565 = arith.addf %564, %563 : vector<2x32xf32>
    %566 = arith.divf %564, %565 : vector<2x32xf32>
    %567 = arith.mulf %558, %498 : vector<2x32xf32>
    %568 = arith.mulf %552, %560 : vector<2x32xf32>
    %569 = arith.addf %567, %568 : vector<2x32xf32>
    %570 = math.tanh %569 : vector<2x32xf32>
    %571 = arith.mulf %566, %570 : vector<2x32xf32>
    %572 = arith.index_cast %c7_i32_132 : i32 to index
    %c0_146 = arith.constant 0 : index
    %c0_147 = arith.constant 0 : index
    %573 = vector.load %arg10[%572, %c0_146, %c0_147] : memref<8x2x32xf32, #tpu.memory_space<vmem>>, vector<1x2x32xf32>
    %574 = vector.shape_cast %573 : vector<1x2x32xf32> to vector<2x32xf32>
    %575 = vector.shape_cast %540 : vector<2x32xf32> to vector<1x2x32xf32>
    tpu.vector_store %arg10[%572, %c0_146, %c0_147], %575 {strides = array<i32>} : memref<8x2x32xf32, #tpu.memory_space<vmem>>, vector<1x2x32xf32>,
    %576 = arith.index_cast %509 : i32 to index
    %c0_148 = arith.constant 0 : index
    %c0_149 = arith.constant 0 : index
    %577 = vector.load %arg11[%576, %c0_148, %c0_149] : memref<8x2x32xf32, #tpu.memory_space<vmem>>, vector<1x2x32xf32>
    %578 = vector.shape_cast %577 : vector<1x2x32xf32> to vector<2x32xf32>
    %579 = vector.shape_cast %571 : vector<2x32xf32> to vector<1x2x32xf32>
    tpu.vector_store %arg11[%576, %c0_148, %c0_149], %579 {strides = array<i32>} : memref<8x2x32xf32, #tpu.memory_space<vmem>>, vector<1x2x32xf32>,
    %c8_i32 = arith.constant 8 : i32
    %c0_150 = arith.constant 0 : index
    %c0_151 = arith.constant 0 : index
    %c0_152 = arith.constant 0 : index
    %580 = vector.load %arg10[%c0_150, %c0_151, %c0_152] : memref<8x2x32xf32, #tpu.memory_space<vmem>>, vector<8x2x32xf32>
    %581 = vector.shape_cast %580 : vector<8x2x32xf32> to vector<16x32xf32>
    %c0_153 = arith.constant 0 : index
    %c0_154 = arith.constant 0 : index
    %c0_155 = arith.constant 0 : index
    %582 = vector.load %arg11[%c0_153, %c0_154, %c0_155] : memref<8x2x32xf32, #tpu.memory_space<vmem>>, vector<8x2x32xf32>
    %583 = vector.shape_cast %582 : vector<8x2x32xf32> to vector<16x32xf32>
    %c0_156 = arith.constant 0 : index
    %c0_157 = arith.constant 0 : index
    %584 = vector.load %arg5[%c0_156, %c0_157] : memref<32x128xf32, #tpu.memory_space<vmem>>, vector<32x128xf32>
    %cst_158 = arith.constant dense<0.000000e+00> : vector<16x128xf32>
    %585 = tpu.matmul %581, %584, %cst_158 {dimension_numbers = #tpu.dot_dimension_numbers<[1], [0], [0], [1], [0, 0, 1, 1], [], []>} : vector<16x32xf32>, vector<32x128xf32>, vector<16x128xf32> -> vector<16x128xf32>
    %c0_159 = arith.constant 0 : index
    %c0_160 = arith.constant 0 : index
    %586 = vector.load %arg6[%c0_159, %c0_160] : memref<32x128xf32, #tpu.memory_space<vmem>>, vector<32x128xf32>
    %cst_161 = arith.constant dense<0.000000e+00> : vector<16x128xf32>
    %587 = tpu.matmul %583, %586, %cst_161 {dimension_numbers = #tpu.dot_dimension_numbers<[1], [0], [0], [1], [0, 0, 1, 1], [], []>} : vector<16x32xf32>, vector<32x128xf32>, vector<16x128xf32> -> vector<16x128xf32>
    %588 = arith.addf %585, %587 : vector<16x128xf32>
    %c0_162 = arith.constant 0 : index
    %c0_163 = arith.constant 0 : index
    %589 = vector.load %arg7[%c0_162, %c0_163] : memref<1x128xf32, #tpu.memory_space<vmem>>, vector<1x128xf32>
    %590 = vector.broadcast %589 : vector<1x128xf32> to vector<16x128xf32>
    %591 = arith.addf %588, %590 : vector<16x128xf32>
    %cst_164 = arith.constant dense<0xFF800000> : vector<16xf32>
    %592 = vector.multi_reduction <maximumf>, %591, %cst_164 [1] : vector<16x128xf32> to vector<16xf32>
    %593 = vector.shape_cast %592 : vector<16xf32> to vector<16x1xf32>
    %594 = vector.broadcast %593 : vector<16x1xf32> to vector<16x128xf32>
    %595 = arith.subf %591, %594 : vector<16x128xf32>
    %596 = math.exp %595 : vector<16x128xf32>
    %cst_165 = arith.constant dense<0.000000e+00> : vector<16xf32>
    %597 = vector.multi_reduction <add>, %596, %cst_165 [1] : vector<16x128xf32> to vector<16xf32>
    %598 = vector.shape_cast %597 : vector<16xf32> to vector<16x1xf32>
    %599 = tpu.reciprocal %598 {approx = true} : vector<16x1xf32> -> vector<16x1xf32>
    %600 = vector.broadcast %599 : vector<16x1xf32> to vector<16x128xf32>
    %601 = arith.mulf %596, %600 : vector<16x128xf32>
    %c0_166 = arith.constant 0 : index
    %c0_167 = arith.constant 0 : index
    %602 = vector.load %arg8[%c0_166, %c0_167] : memref<16x128xf32, #tpu.memory_space<vmem>>, vector<16x128xf32>
    tpu.vector_store %arg8[%c0_166, %c0_167], %601 {strides = array<i32>} : memref<16x128xf32, #tpu.memory_space<vmem>>, vector<16x128xf32>,
    return
  }
}

</mosaic_0001>

<llo_original>
// kernel: tpu_custom_call.1
$region0: #{tpu_custom_call.1}
  #allocation0 [shape = 'u32[]', space=smem, size = 0x4, offset = 0x4, fixed_abs, tag = 'smem constant byte address 0x4 - core index']
  #allocation1 [shape = 'u32[72,128]{1,0:T(1,128)}', space=vmem, size = 0x9000, scoped, tag = 'internal scratch']
  #allocation2 [shape = 'f32[8,2,256]{2,1,0:T(2,128)}', space=vmem, size = 0x4000, scoped, tag = 'scratch operand']
  #allocation3 [shape = 'f32[8,2,32]{2,1,0:T(2,128)}', space=vmem, size = 0x2000, scoped, tag = 'scratch operand']
  #allocation4 [shape = 'f32[8,2,32]{2,1,0:T(2,128)}', space=vmem, size = 0x2000, scoped, tag = 'scratch operand']
  %s0 = inlined_call_operand.hbm [shape: f32[8,2,16], index: 0, kind: input, shape index: {}]
  %s1 = inlined_call_operand.hbm [shape: f32[16,256], index: 1, kind: input, shape index: {}]
  %s2 = inlined_call_operand.hbm [shape: f32[1,256], index: 2, kind: input, shape index: {}]
  %s3 = inlined_call_operand.hbm [shape: f32[32,128], index: 3, kind: input, shape index: {}]
  %s4 = inlined_call_operand.hbm [shape: f32[32,128], index: 4, kind: input, shape index: {}]
  %s5 = inlined_call_operand.hbm [shape: f32[32,128], index: 5, kind: input, shape index: {}]
  %s6 = inlined_call_operand.hbm [shape: f32[32,128], index: 6, kind: input, shape index: {}]
  %s7 = inlined_call_operand.vmem [shape: f32[1,128], index: 7, kind: input, shape index: {}]
  %s8 = inlined_call_operand.hbm [shape: f32[16,128], index: 8, kind: output, shape index: {}]
  %s9 = sld [smem:[#allocation0]]
  $region70: #{tpu_custom_call.1} parent=0
    _
  %s11 = ssub.s32 1, %s9
  %s12 = scalar_select 0, %s11, %s9
  $region1: #{tpu_custom_call.1} parent=0
    #allocation5 [shape = 'u8[8192]{0}', space=vmem, size = 0x2000, scoped, tag = 'input window, operand 0, single buffered']
    #allocation6 [shape = 's32[1]{0}', space=sflag, size = 0x4, scoped, tag = 'scoped memory for tpu_custom_call.1']
    #allocation7 [shape = 's32[1]{0}', space=sflag, size = 0x4, scoped, tag = 'scoped memory for tpu_custom_call.1']
    #allocation8 [shape = 'u8[16384]{0}', space=vmem, size = 0x4000, scoped, tag = 'input window, operand 1, single buffered']
    #allocation9 [shape = 's32[1]{0}', space=sflag, size = 0x4, scoped, tag = 'scoped memory for tpu_custom_call.1']
    #allocation10 [shape = 'u8[1024]{0}', space=vmem, size = 0x400, scoped, tag = 'input window, operand 2, single buffered']
    #allocation11 [shape = 'u8[16384]{0}', space=vmem, size = 0x4000, scoped, tag = 'input window, operand 3, single buffered']
    #allocation12 [shape = 's32[1]{0}', space=sflag, size = 0x4, scoped, tag = 'scoped memory for tpu_custom_call.1']
    #allocation13 [shape = 'u8[16384]{0}', space=vmem, size = 0x4000, scoped, tag = 'input window, operand 4, single buffered']
    #allocation14 [shape = 'u8[16384]{0}', space=vmem, size = 0x4000, scoped, tag = 'input window, operand 5, single buffered']
    #allocation15 [shape = 's32[1]{0}', space=sflag, size = 0x4, scoped, tag = 'scoped memory for tpu_custom_call.1']
    #allocation16 [shape = 'u8[16384]{0}', space=vmem, size = 0x4000, scoped, tag = 'input window, operand 6, single buffered']
    #allocation17 [shape = 'u8[8192]{0}', space=vmem, size = 0x2000, scoped, tag = 'output window, operand 0, single buffered']
    %13 = vsyncpa [#allocation6], 0
    %14 = vsyncpa [#allocation9], 0
    %15 = vsyncpa [#allocation12], 0
    %16 = vsyncpa [#allocation15], 0
    %17 = vsyncpa [#allocation7], 0
    // Predicated region
    $region2: #{tpu_custom_call.1} parent=1 // pred_check
      _
    $region3: #{tpu_custom_call.1} parent=1 // pred_check_branch
      %19 = sbr.rel (0) target = $region5
    $region4: #{tpu_custom_call.1} parent=1 // pred_region
      %21 = vsyncadd [#allocation6], 0
      %s22 = sshll.u32 %s0, 4
      %s23 = int_to_ptr.hbm [resolvable:$true] %s22
      %s24 = sshll.u32 [#allocation5], 4
      %s25 = int_to_ptr.vmem [resolvable:$true] %s24
      %30 = dma.hbm_to_vmem [thread:$0]  %s23, 256, %s25, [#allocation6], 32, 32, 2
    $region5: #{tpu_custom_call.1} parent=1 // pred_fallthru
      _
    // Predicated region
    $region6: #{tpu_custom_call.1} parent=1 // pred_check
      _
    $region7: #{tpu_custom_call.1} parent=1 // pred_check_branch
      %32 = sbr.rel (0) target = $region9
    $region8: #{tpu_custom_call.1} parent=1 // pred_region
      %34 = vsyncadd [#allocation9], 0
      %s35 = sshll.u32 %s1, 4
      %s36 = int_to_ptr.hbm [resolvable:$true] %s35
      %s37 = sshll.u32 [#allocation8], 4
      %s38 = int_to_ptr.vmem [resolvable:$true] %s37
      %43 = dma.hbm_to_vmem [thread:$0]  %s36, 512, %s38, [#allocation9], 256, 256, 16
    $region9: #{tpu_custom_call.1} parent=1 // pred_fallthru
      _
    // Predicated region
    $region10: #{tpu_custom_call.1} parent=1 // pred_check
      _
    $region11: #{tpu_custom_call.1} parent=1 // pred_check_branch
      %45 = sbr.rel (0) target = $region13
    $region12: #{tpu_custom_call.1} parent=1 // pred_region
      %47 = vsyncadd [#allocation9], 0
      %s49 = sshll.u32 %s2, 4
      %s50 = int_to_ptr.hbm [resolvable:$true] %s49
      %s51 = sshll.u32 [#allocation10], 4
      %s52 = int_to_ptr.vmem [resolvable:$true] %s51
      %54 = dma.hbm_to_vmem [thread:$0]  %s50, 32, %s52, [#allocation9]
    $region13: #{tpu_custom_call.1} parent=1 // pred_fallthru
      _
    // Predicated region
    $region14: #{tpu_custom_call.1} parent=1 // pred_check
      _
    $region15: #{tpu_custom_call.1} parent=1 // pred_check_branch
      %56 = sbr.rel (0) target = $region17
    $region16: #{tpu_custom_call.1} parent=1 // pred_region
      %58 = vsyncadd [#allocation12], 0
      %s59 = sshll.u32 %s3, 4
      %s60 = int_to_ptr.hbm [resolvable:$true] %s59
      %s61 = sshll.u32 [#allocation11], 4
      %s62 = int_to_ptr.vmem [resolvable:$true] %s61
      %67 = dma.hbm_to_vmem [thread:$0]  %s60, 512, %s62, [#allocation12], 128, 128, 8
    $region17: #{tpu_custom_call.1} parent=1 // pred_fallthru
      _
    // Predicated region
    $region18: #{tpu_custom_call.1} parent=1 // pred_check
      _
    $region19: #{tpu_custom_call.1} parent=1 // pred_check_branch
      %69 = sbr.rel (0) target = $region21
    $region20: #{tpu_custom_call.1} parent=1 // pred_region
      %71 = vsyncadd [#allocation12], 0
      %s72 = sshll.u32 %s4, 4
      %s73 = int_to_ptr.hbm [resolvable:$true] %s72
      %s74 = sshll.u32 [#allocation13], 4
      %s75 = int_to_ptr.vmem [resolvable:$true] %s74
      %80 = dma.hbm_to_vmem [thread:$0]  %s73, 512, %s75, [#allocation12], 128, 128, 8
    $region21: #{tpu_custom_call.1} parent=1 // pred_fallthru
      _
    // Predicated region
    $region22: #{tpu_custom_call.1} parent=1 // pred_check
      _
    $region23: #{tpu_custom_call.1} parent=1 // pred_check_branch
      %82 = sbr.rel (0) target = $region25
    $region24: #{tpu_custom_call.1} parent=1 // pred_region
      %84 = vsyncadd [#allocation15], 0
      %s85 = sshll.u32 %s5, 4
      %s86 = int_to_ptr.hbm [resolvable:$true] %s85
      %s87 = sshll.u32 [#allocation14], 4
      %s88 = int_to_ptr.vmem [resolvable:$true] %s87
      %93 = dma.hbm_to_vmem [thread:$0]  %s86, 512, %s88, [#allocation15], 128, 128, 8
    $region25: #{tpu_custom_call.1} parent=1 // pred_fallthru
      _
    // Predicated region
    $region26: #{tpu_custom_call.1} parent=1 // pred_check
      _
    $region27: #{tpu_custom_call.1} parent=1 // pred_check_branch
      %95 = sbr.rel (0) target = $region29
    $region28: #{tpu_custom_call.1} parent=1 // pred_region
      %97 = vsyncadd [#allocation15], 0
      %s98 = sshll.u32 %s6, 4
      %s99 = int_to_ptr.hbm [resolvable:$true] %s98
      %s100 = sshll.u32 [#allocation16], 4
      %s101 = int_to_ptr.vmem [resolvable:$true] %s100
      %106 = dma.hbm_to_vmem [thread:$0]  %s99, 512, %s101, [#allocation15], 128, 128, 8
    $region29: #{tpu_custom_call.1} parent=1 // pred_fallthru
      _
    // Predicated region
    $region30: #{tpu_custom_call.1} parent=1 // pred_check
      _
    $region31: #{tpu_custom_call.1} parent=1 // pred_check_branch
      %108 = sbr.rel (0) target = $region33
    $region32: #{tpu_custom_call.1} parent=1 // pred_region
      _
    $region33: #{tpu_custom_call.1} parent=1 // pred_fallthru
      _
    // Predicated region
    $region34: #{tpu_custom_call.1} parent=1 // pred_check
      _
    $region35: #{tpu_custom_call.1} parent=1 // pred_check_branch
      %110 = sbr.rel (0) target = $region37
    $region36: #{tpu_custom_call.1} parent=1 // pred_region
      %112 = dma.done [#allocation6], 256
    $region37: #{tpu_custom_call.1} parent=1 // pred_fallthru
      _
    // Predicated region
    $region38: #{tpu_custom_call.1} parent=1 // pred_check
      _
    $region39: #{tpu_custom_call.1} parent=1 // pred_check_branch
      %114 = sbr.rel (0) target = $region41
    $region40: #{tpu_custom_call.1} parent=1 // pred_region
      %116 = dma.done [#allocation9], 512
    $region41: #{tpu_custom_call.1} parent=1 // pred_fallthru
      _
    // Predicated region
    $region42: #{tpu_custom_call.1} parent=1 // pred_check
      _
    $region43: #{tpu_custom_call.1} parent=1 // pred_check_branch
      %118 = sbr.rel (0) target = $region45
    $region44: #{tpu_custom_call.1} parent=1 // pred_region
      %120 = dma.done [#allocation9], 32
    $region45: #{tpu_custom_call.1} parent=1 // pred_fallthru
      _
    // Predicated region
    $region46: #{tpu_custom_call.1} parent=1 // pred_check
      _
    $region47: #{tpu_custom_call.1} parent=1 // pred_check_branch
      %122 = sbr.rel (0) target = $region49
    $region48: #{tpu_custom_call.1} parent=1 // pred_region
      %124 = dma.done [#allocation12], 512
    $region49: #{tpu_custom_call.1} parent=1 // pred_fallthru
      _
    // Predicated region
    $region50: #{tpu_custom_call.1} parent=1 // pred_check
      _
    $region51: #{tpu_custom_call.1} parent=1 // pred_check_branch
      %126 = sbr.rel (0) target = $region53
    $region52: #{tpu_custom_call.1} parent=1 // pred_region
      %128 = dma.done [#allocation12], 512
    $region53: #{tpu_custom_call.1} parent=1 // pred_fallthru
      _
    // Predicated region
    $region54: #{tpu_custom_call.1} parent=1 // pred_check
      _
    $region55: #{tpu_custom_call.1} parent=1 // pred_check_branch
      %130 = sbr.rel (0) target = $region57
    $region56: #{tpu_custom_call.1} parent=1 // pred_region
      %132 = dma.done [#allocation15], 512
    $region57: #{tpu_custom_call.1} parent=1 // pred_fallthru
      _
    // Predicated region
    $region58: #{tpu_custom_call.1} parent=1 // pred_check
      _
    $region59: #{tpu_custom_call.1} parent=1 // pred_check_branch
      %134 = sbr.rel (0) target = $region61
    $region60: #{tpu_custom_call.1} parent=1 // pred_region
      %136 = dma.done [#allocation15], 512
    $region61: #{tpu_custom_call.1} parent=1 // pred_fallthru
      _
    %v137 = vld [vmem:[#allocation5] sm:$0x3]
    %v138 = vld [vmem:[#allocation5 + $0x2] sm:$0x3]
    %v139 = vld [vmem:[#allocation5 + $0x4] sm:$0x3]
    %v140 = vld [vmem:[#allocation5 + $0x6] sm:$0x3]
    %v141 = vld [vmem:[#allocation5 + $0x8] sm:$0x3]
    %v142 = vld [vmem:[#allocation5 + $0xa] sm:$0x3]
    %v143 = vld [vmem:[#allocation5 + $0xc] sm:$0x3]
    %v144 = vld [vmem:[#allocation5 + $0xe] sm:$0x3]
    %v145 = vld [vmem:[#allocation8] sm:$0xff]
    %v146 = vld [vmem:[#allocation8 + $0x8] sm:$0xff]
    %v147 = vld [vmem:[#allocation8 + $0x10] sm:$0xff]
    %v148 = vld [vmem:[#allocation8 + $0x18] sm:$0xff]
    %v149 = vld [vmem:[#allocation10] sm:$0x3]
    %v151 = vperm.slane %v149, 0
    %v152 = vperm.slane %v149, 1
    %163 = vst [vmem:[#allocation1] ss:$4 sm:$0xff] %v137
    %s164 = scalar_lea.vmem [#allocation1], 1
    %165 = vst [vmem:[%s164] ss:$4 sm:$0xff] %v138
    %s166 = scalar_lea.vmem [#allocation1], 2
    %167 = vst [vmem:[%s166] ss:$4 sm:$0xff] %v139
    %s168 = scalar_lea.vmem [#allocation1], 3
    %169 = vst [vmem:[%s168] ss:$4 sm:$0xff] %v140
    %s170 = scalar_lea.vmem [#allocation1], 32
    %171 = vst [vmem:[%s170] ss:$4 sm:$0xff] %v141
    %s172 = scalar_lea.vmem [#allocation1], 33
    %173 = vst [vmem:[%s172] ss:$4 sm:$0xff] %v142
    %s174 = scalar_lea.vmem [#allocation1], 34
    %175 = vst [vmem:[%s174] ss:$4 sm:$0xff] %v143
    %s176 = scalar_lea.vmem [#allocation1], 35
    %177 = vst [vmem:[%s176] ss:$4 sm:$0xff] %v144
    %v178 = vld.sshfl [vmem:[#allocation1] sm:$0xff pattern:$0x73625140]
    %v179 = vld.sshfl [vmem:[#allocation1 + $0x20] sm:$0xff pattern:$0x73625140]
    %vm180 = vcmask 130048
    %v181 = vsel %vm180, %v178, 0
    %v183 = vsel %vm180, %v179, 0
    %185 = vmatpush.msra.mxu0 0.0
    %186 = vmatpush.msra.mxu0 0.0
    %187 = vmatpush.msra.mxu0 0.0
    %188 = vmatpush.msra.mxu0 0.0
    %189 = vmatpush.msra.mxu0 0.0
    %190 = vmatpush.msra.mxu0 0.0
    %191 = vmatpush.msra.mxu0 0.0
    %192 = vmatpush.msra.mxu0 0.0
    %193 = vmatpush.msra.mxu0 0.0
    %194 = vmatpush.msra.mxu0 0.0
    %195 = vmatpush.msra.mxu0 0.0
    %196 = vmatpush.msra.mxu0 0.0
    %197 = vmatpush.msra.mxu0 0.0
    %198 = vmatpush.msra.mxu0 0.0
    %199 = vmatpush.msra.mxu0 %v147
    %200 = vmatpush.msra.mxu0 %v145
    %201 = vmatmul.f32.gmra.mxu0 %v181
    %v202 = vpop.f32.mrf.mxu0
    %v203 = vadd.f32 %v151, %v202
    %204 = vmatmul.f32.gmra.mxu0 %v183
    %v205 = vpop.f32.mrf.mxu0
    %v206 = vadd.f32 %v151, %v205
    %207 = vdwg.mxu0
    %208 = vmatpush.msra.mxu0 0.0
    %209 = vmatpush.msra.mxu0 0.0
    %210 = vmatpush.msra.mxu0 0.0
    %211 = vmatpush.msra.mxu0 0.0
    %212 = vmatpush.msra.mxu0 0.0
    %213 = vmatpush.msra.mxu0 0.0
    %214 = vmatpush.msra.mxu0 0.0
    %215 = vmatpush.msra.mxu0 0.0
    %216 = vmatpush.msra.mxu0 0.0
    %217 = vmatpush.msra.mxu0 0.0
    %218 = vmatpush.msra.mxu0 0.0
    %219 = vmatpush.msra.mxu0 0.0
    %220 = vmatpush.msra.mxu0 0.0
    %221 = vmatpush.msra.mxu0 0.0
    %222 = vmatpush.msra.mxu0 %v148
    %223 = vmatpush.msra.mxu0 %v146
    %224 = vmatmul.f32.gmra.mxu0 %v181
    %v225 = vpop.f32.mrf.mxu0
    %v226 = vadd.f32 %v152, %v225
    %227 = vmatmul.f32.gmra.mxu0 %v183
    %v228 = vpop.f32.mrf.mxu0
    %v229 = vadd.f32 %v152, %v228
    %230 = vdwg.mxu0
    %v235 = vrot.slane %v226, 6
    %v236 = vrot.slane %v229, 6
    %vm237 = vcmask 1041408
    %v238 = vsel %vm237, %v203, %v235
    %vm239 = vcmask 1043458
    %v240 = vsel %vm239, %v203, %v235
    %v241 = vrot.slane %v240, 2
    %vm242 = vcmask 1045508
    %v243 = vsel %vm242, %v203, %v235
    %v244 = vrot.slane %v243, 4
    %vm245 = vcmask 1045504
    %v246 = vsel %vm245, %v235, %v203
    %v247 = vrot.slane %v246, 6
    %v248 = vsel %vm237, %v206, %v236
    %v249 = vsel %vm239, %v206, %v236
    %v250 = vrot.slane %v249, 2
    %v251 = vsel %vm242, %v206, %v236
    %v252 = vrot.slane %v251, 4
    %v253 = vsel %vm245, %v236, %v206
    %v254 = vrot.slane %v253, 6
    %263 = vst [vmem:[#allocation2] sm:$0xf] %v238
    %264 = vst [vmem:[#allocation2 + $0x4] sm:$0xf] %v241
    %265 = vst [vmem:[#allocation2 + $0x8] sm:$0xf] %v244
    %266 = vst [vmem:[#allocation2 + $0xc] sm:$0xf] %v247
    %267 = vst [vmem:[#allocation2 + $0x10] sm:$0xf] %v248
    %268 = vst [vmem:[#allocation2 + $0x14] sm:$0xf] %v250
    %269 = vst [vmem:[#allocation2 + $0x18] sm:$0xf] %v252
    %270 = vst [vmem:[#allocation2 + $0x1c] sm:$0xf] %v254
    %v271 = vld [vmem:[#allocation11] sm:$0xff]
    %v272 = vld [vmem:[#allocation11 + $0x8] sm:$0xff]
    %v273 = vld [vmem:[#allocation11 + $0x10] sm:$0xff]
    %v274 = vld [vmem:[#allocation11 + $0x18] sm:$0xff]
    %v275 = vld [vmem:[#allocation13] sm:$0xff]
    %v276 = vld [vmem:[#allocation13 + $0x8] sm:$0xff]
    %v277 = vld [vmem:[#allocation13 + $0x10] sm:$0xff]
    %v278 = vld [vmem:[#allocation13 + $0x18] sm:$0xff]
    %v279 = vld [vmem:[#allocation2] sm:$0xf]
    %vm280 = vcmask 261120
    %v282 = vsel %vm280, 0.0, 0
    %284 = vmatpush.msra.mxu0 0.0
    %285 = vmatpush.msra.mxu0 0.0
    %286 = vmatpush.msra.mxu0 0.0
    %287 = vmatpush.msra.mxu0 0.0
    %288 = vmatpush.msra.mxu0 0.0
    %289 = vmatpush.msra.mxu0 0.0
    %290 = vmatpush.msra.mxu0 0.0
    %291 = vmatpush.msra.mxu0 0.0
    %292 = vmatpush.msra.mxu0 0.0
    %293 = vmatpush.msra.mxu0 0.0
    %294 = vmatpush.msra.mxu0 0.0
    %295 = vmatpush.msra.mxu0 0.0
    %296 = vmatpush.msra.mxu0 %v274
    %297 = vmatpush.msra.mxu0 %v273
    %298 = vmatpush.msra.mxu0 %v272
    %299 = vmatpush.msra.mxu0 %v271
    %300 = vmatmul.f32.gmra.mxu0 %v282
    %v301 = vpop.f32.mrf.mxu0
    %v302 = vadd.f32 0.0, %v301
    %303 = vdwg.mxu0
    %v304 = vadd.f32 %v279, %v302
    %v305 = vxor.u32 %v304, 2147483648
    %v306 = vmul.f32 %v305, 1.442695
    %v307 = vpow.pop %v306
    %v308 = vadd.f32 %v307, 1.0
    %v309 = vrcp.pop %v308
    %v310 = vmul.f32 %v308, %v309
    %v311 = vsub.f32 1.0, %v310
    %v312 = vmul.f32 %v309, %v311
    %v313 = vadd.f32 %v309, %v312
    %vm314 = vweird.f32 %v308
    %vm315 = vweird.f32 %v309
    %vm316 = vmor %vm314, %vm315
    %v317 = vsel %vm316, %v309, %v313
    %v318 = vand.u32 2147483647, %v308
    %vm319 = vcmp.eq.f32.partialorder %v318, 8.507059e+37
    %v320 = vand.u32 %v308, 2147483648
    %v321 = vor.u32 1.1754944e-38, %v320
    %v322 = vsel %vm319, %v321, %v317
    %v323 = vmul.f32 1.0, %v322
    %v324 = vtanh.pop %v304
    %v325 = vmul.f32 %v323, 0.0
    %327 = vrot.lane.b32.xlu0 %v324, 64
    %v328 = vpop.permute.xlu0 %327
    %v330 = vmul.f32 %v323, %v328
    %332 = vrot.lane.b32.xlu0 %v330, 32
    %v333 = vpop.permute.xlu0 %332
    %v335 = vadd.f32 %v325, %v333
    %v336 = vtanh.pop %v335
    %338 = vrot.lane.b32.xlu0 %v336, 64
    %v339 = vpop.permute.xlu0 %338
    %v341 = vmul.f32 %v323, %v339
    %s342 = scalar_lea.vmem [#allocation2], 28
    %v343 = vld [vmem:[%s342] sm:$0xf]
    %344 = vmatpush.msra.mxu0 0.0
    %345 = vmatpush.msra.mxu0 0.0
    %346 = vmatpush.msra.mxu0 0.0
    %347 = vmatpush.msra.mxu0 0.0
    %348 = vmatpush.msra.mxu0 0.0
    %349 = vmatpush.msra.mxu0 0.0
    %350 = vmatpush.msra.mxu0 0.0
    %351 = vmatpush.msra.mxu0 0.0
    %352 = vmatpush.msra.mxu0 0.0
    %353 = vmatpush.msra.mxu0 0.0
    %354 = vmatpush.msra.mxu0 0.0
    %355 = vmatpush.msra.mxu0 0.0
    %356 = vmatpush.msra.mxu0 %v278
    %357 = vmatpush.msra.mxu0 %v277
    %358 = vmatpush.msra.mxu0 %v276
    %359 = vmatpush.msra.mxu0 %v275
    %360 = vmatmul.f32.gmra.mxu0 %v282
    %v361 = vpop.f32.mrf.mxu0
    %v362 = vadd.f32 0.0, %v361
    %363 = vdwg.mxu0
    %v365 = vrot.slane %v343, 2
    %v367 = vadd.f32 %v365, %v362
    %v368 = vxor.u32 %v367, 2147483648
    %v369 = vmul.f32 %v368, 1.442695
    %v370 = vpow.pop %v369
    %v371 = vadd.f32 %v370, 1.0
    %v372 = vrcp.pop %v371
    %v373 = vmul.f32 %v371, %v372
    %v374 = vsub.f32 1.0, %v373
    %v375 = vmul.f32 %v372, %v374
    %v376 = vadd.f32 %v372, %v375
    %vm377 = vweird.f32 %v371
    %vm378 = vweird.f32 %v372
    %vm379 = vmor %vm377, %vm378
    %v380 = vsel %vm379, %v372, %v376
    %v381 = vand.u32 2147483647, %v371
    %vm382 = vcmp.eq.f32.partialorder %v381, 8.507059e+37
    %v383 = vand.u32 %v371, 2147483648
    %v384 = vor.u32 1.1754944e-38, %v383
    %v385 = vsel %vm382, %v384, %v380
    %v386 = vmul.f32 1.0, %v385
    %v387 = vtanh.pop %v367
    %v388 = vmul.f32 %v386, 0.0
    %390 = vrot.lane.b32.xlu0 %v387, 64
    %v391 = vpop.permute.xlu0 %390
    %v393 = vmul.f32 %v386, %v391
    %395 = vrot.lane.b32.xlu0 %v393, 32
    %v396 = vpop.permute.xlu0 %395
    %v398 = vadd.f32 %v388, %v396
    %v399 = vtanh.pop %v398
    %401 = vrot.lane.b32.xlu0 %v399, 64
    %v402 = vpop.permute.xlu0 %401
    %v404 = vmul.f32 %v386, %v402
    %406 = vst [vmem:[#allocation1] ss:$4 sm:$0xff] %v341
    %v407 = vld.sshfl [vmem:[#allocation1] sm:$0xff pattern:$0x73625140]
    %408 = vrot.lane.b32.xlu0 %v407, 32
    %v409 = vpop.permute.xlu0 %408
    %vm411 = vcmask 254976
    %412 = vst.msk [vmem:[#allocation3] sm:$0x3] %vm411, %v409
    %414 = vst [vmem:[#allocation1] ss:$4 sm:$0xff] %v404
    %v415 = vld.sshfl [vmem:[#allocation1] sm:$0xff pattern:$0x73625140]
    %416 = vrot.lane.b32.xlu0 %v415, 32
    %v417 = vpop.permute.xlu0 %416
    %s419 = scalar_lea.vmem [#allocation4], 14
    %420 = vst.msk [vmem:[%s419] sm:$0x3] %vm411, %v417
    %s421 = scalar_lea.vmem [#allocation2], 4
    %v422 = vld [vmem:[%s421] sm:$0xf]
    %423 = vst [vmem:[#allocation1] ss:$4 sm:$0xff] %v341
    %v424 = vld.sshfl [vmem:[#allocation1] sm:$0xff pattern:$0x73625140]
    %425 = vrot.lane.b32.xlu0 %v424, 32
    %v426 = vpop.permute.xlu0 %425
    %v427 = vsel %vm280, %v426, 0
    %429 = vmatpush.msra.mxu0 0.0
    %430 = vmatpush.msra.mxu0 0.0
    %431 = vmatpush.msra.mxu0 0.0
    %432 = vmatpush.msra.mxu0 0.0
    %433 = vmatpush.msra.mxu0 0.0
    %434 = vmatpush.msra.mxu0 0.0
    %435 = vmatpush.msra.mxu0 0.0
    %436 = vmatpush.msra.mxu0 0.0
    %437 = vmatpush.msra.mxu0 0.0
    %438 = vmatpush.msra.mxu0 0.0
    %439 = vmatpush.msra.mxu0 0.0
    %440 = vmatpush.msra.mxu0 0.0
    %441 = vmatpush.msra.mxu0 %v274
    %442 = vmatpush.msra.mxu0 %v273
    %443 = vmatpush.msra.mxu0 %v272
    %444 = vmatpush.msra.mxu0 %v271
    %445 = vmatmul.f32.gmra.mxu0 %v427
    %v446 = vpop.f32.mrf.mxu0
    %v447 = vadd.f32 0.0, %v446
    %448 = vdwg.mxu0
    %v449 = vadd.f32 %v422, %v447
    %v450 = vxor.u32 %v449, 2147483648
    %v451 = vmul.f32 %v450, 1.442695
    %v452 = vpow.pop %v451
    %v453 = vadd.f32 %v452, 1.0
    %v454 = vrcp.pop %v453
    %v455 = vmul.f32 %v453, %v454
    %v456 = vsub.f32 1.0, %v455
    %v457 = vmul.f32 %v454, %v456
    %v458 = vadd.f32 %v454, %v457
    %vm459 = vweird.f32 %v453
    %vm460 = vweird.f32 %v454
    %vm461 = vmor %vm459, %vm460
    %v462 = vsel %vm461, %v454, %v458
    %v463 = vand.u32 2147483647, %v453
    %vm464 = vcmp.eq.f32.partialorder %v463, 8.507059e+37
    %v465 = vand.u32 %v453, 2147483648
    %v466 = vor.u32 1.1754944e-38, %v465
    %v467 = vsel %vm464, %v466, %v462
    %v468 = vmul.f32 1.0, %v467
    %v469 = vtanh.pop %v449
    %v470 = vmul.f32 %v468, %v335
    %472 = vrot.lane.b32.xlu0 %v469, 64
    %v473 = vpop.permute.xlu0 %472
    %v475 = vmul.f32 %v468, %v473
    %477 = vrot.lane.b32.xlu0 %v475, 32
    %v478 = vpop.permute.xlu0 %477
    %v480 = vadd.f32 %v470, %v478
    %v481 = vtanh.pop %v480
    %483 = vrot.lane.b32.xlu0 %v481, 64
    %v484 = vpop.permute.xlu0 %483
    %v486 = vmul.f32 %v468, %v484
    %s487 = scalar_lea.vmem [#allocation2], 24
    %v488 = vld [vmem:[%s487] sm:$0xf]
    %489 = vst [vmem:[#allocation1] ss:$4 sm:$0xff] %v404
    %v490 = vld.sshfl [vmem:[#allocation1] sm:$0xff pattern:$0x73625140]
    %491 = vrot.lane.b32.xlu0 %v490, 32
    %v492 = vpop.permute.xlu0 %491
    %v493 = vsel %vm280, %v492, 0
    %495 = vmatpush.msra.mxu0 0.0
    %496 = vmatpush.msra.mxu0 0.0
    %497 = vmatpush.msra.mxu0 0.0
    %498 = vmatpush.msra.mxu0 0.0
    %499 = vmatpush.msra.mxu0 0.0
    %500 = vmatpush.msra.mxu0 0.0
    %501 = vmatpush.msra.mxu0 0.0
    %502 = vmatpush.msra.mxu0 0.0
    %503 = vmatpush.msra.mxu0 0.0
    %504 = vmatpush.msra.mxu0 0.0
    %505 = vmatpush.msra.mxu0 0.0
    %506 = vmatpush.msra.mxu0 0.0
    %507 = vmatpush.msra.mxu0 %v278
    %508 = vmatpush.msra.mxu0 %v277
    %509 = vmatpush.msra.mxu0 %v276
    %510 = vmatpush.msra.mxu0 %v275
    %511 = vmatmul.f32.gmra.mxu0 %v493
    %v512 = vpop.f32.mrf.mxu0
    %v513 = vadd.f32 0.0, %v512
    %514 = vdwg.mxu0
    %v516 = vrot.slane %v488, 2
    %v518 = vadd.f32 %v516, %v513
    %v519 = vxor.u32 %v518, 2147483648
    %v520 = vmul.f32 %v519, 1.442695
    %v521 = vpow.pop %v520
    %v522 = vadd.f32 %v521, 1.0
    %v523 = vrcp.pop %v522
    %v524 = vmul.f32 %v522, %v523
    %v525 = vsub.f32 1.0, %v524
    %v526 = vmul.f32 %v523, %v525
    %v527 = vadd.f32 %v523, %v526
    %vm528 = vweird.f32 %v522
    %vm529 = vweird.f32 %v523
    %vm530 = vmor %vm528, %vm529
    %v531 = vsel %vm530, %v523, %v527
    %v532 = vand.u32 2147483647, %v522
    %vm533 = vcmp.eq.f32.partialorder %v532, 8.507059e+37
    %v534 = vand.u32 %v522, 2147483648
    %v535 = vor.u32 1.1754944e-38, %v534
    %v536 = vsel %vm533, %v535, %v531
    %v537 = vmul.f32 1.0, %v536
    %v538 = vtanh.pop %v518
    %v539 = vmul.f32 %v537, %v398
    %541 = vrot.lane.b32.xlu0 %v538, 64
    %v542 = vpop.permute.xlu0 %541
    %v544 = vmul.f32 %v537, %v542
    %546 = vrot.lane.b32.xlu0 %v544, 32
    %v547 = vpop.permute.xlu0 %546
    %v549 = vadd.f32 %v539, %v547
    %v550 = vtanh.pop %v549
    %552 = vrot.lane.b32.xlu0 %v550, 64
    %v553 = vpop.permute.xlu0 %552
    %v555 = vmul.f32 %v537, %v553
    %557 = vst [vmem:[#allocation1] ss:$4 sm:$0xff] %v486
    %v558 = vld.sshfl [vmem:[#allocation1] sm:$0xff pattern:$0x73625140]
    %559 = vrot.lane.b32.xlu0 %v558, 32
    %v560 = vpop.permute.xlu0 %559
    %s562 = scalar_lea.vmem [#allocation3], 2
    %563 = vst.msk [vmem:[%s562] sm:$0x3] %vm411, %v560
    %565 = vst [vmem:[#allocation1] ss:$4 sm:$0xff] %v555
    %v566 = vld.sshfl [vmem:[#allocation1] sm:$0xff pattern:$0x73625140]
    %567 = vrot.lane.b32.xlu0 %v566, 32
    %v568 = vpop.permute.xlu0 %567
    %s570 = scalar_lea.vmem [#allocation4], 12
    %571 = vst.msk [vmem:[%s570] sm:$0x3] %vm411, %v568
    %s572 = scalar_lea.vmem [#allocation2], 8
    %v573 = vld [vmem:[%s572] sm:$0xf]
    %574 = vst [vmem:[#allocation1] ss:$4 sm:$0xff] %v486
    %v575 = vld.sshfl [vmem:[#allocation1] sm:$0xff pattern:$0x73625140]
    %576 = vrot.lane.b32.xlu0 %v575, 32
    %v577 = vpop.permute.xlu0 %576
    %v578 = vsel %vm280, %v577, 0
    %580 = vmatpush.msra.mxu0 0.0
    %581 = vmatpush.msra.mxu0 0.0
    %582 = vmatpush.msra.mxu0 0.0
    %583 = vmatpush.msra.mxu0 0.0
    %584 = vmatpush.msra.mxu0 0.0
    %585 = vmatpush.msra.mxu0 0.0
    %586 = vmatpush.msra.mxu0 0.0
    %587 = vmatpush.msra.mxu0 0.0
    %588 = vmatpush.msra.mxu0 0.0
    %589 = vmatpush.msra.mxu0 0.0
    %590 = vmatpush.msra.mxu0 0.0
    %591 = vmatpush.msra.mxu0 0.0
    %592 = vmatpush.msra.mxu0 %v274
    %593 = vmatpush.msra.mxu0 %v273
    %594 = vmatpush.msra.mxu0 %v272
    %595 = vmatpush.msra.mxu0 %v271
    %596 = vmatmul.f32.gmra.mxu0 %v578
    %v597 = vpop.f32.mrf.mxu0
    %v598 = vadd.f32 0.0, %v597
    %599 = vdwg.mxu0
    %v600 = vadd.f32 %v573, %v598
    %v601 = vxor.u32 %v600, 2147483648
    %v602 = vmul.f32 %v601, 1.442695
    %v603 = vpow.pop %v602
    %v604 = vadd.f32 %v603, 1.0
    %v605 = vrcp.pop %v604
    %v606 = vmul.f32 %v604, %v605
    %v607 = vsub.f32 1.0, %v606
    %v608 = vmul.f32 %v605, %v607
    %v609 = vadd.f32 %v605, %v608
    %vm610 = vweird.f32 %v604
    %vm611 = vweird.f32 %v605
    %vm612 = vmor %vm610, %vm611
    %v613 = vsel %vm612, %v605, %v609
    %v614 = vand.u32 2147483647, %v604
    %vm615 = vcmp.eq.f32.partialorder %v614, 8.507059e+37
    %v616 = vand.u32 %v604, 2147483648
    %v617 = vor.u32 1.1754944e-38, %v616
    %v618 = vsel %vm615, %v617, %v613
    %v619 = vmul.f32 1.0, %v618
    %v620 = vtanh.pop %v600
    %v621 = vmul.f32 %v619, %v480
    %623 = vrot.lane.b32.xlu0 %v620, 64
    %v624 = vpop.permute.xlu0 %623
    %v626 = vmul.f32 %v619, %v624
    %628 = vrot.lane.b32.xlu0 %v626, 32
    %v629 = vpop.permute.xlu0 %628
    %v631 = vadd.f32 %v621, %v629
    %v632 = vtanh.pop %v631
    %634 = vrot.lane.b32.xlu0 %v632, 64
    %v635 = vpop.permute.xlu0 %634
    %v637 = vmul.f32 %v619, %v635
    %s638 = scalar_lea.vmem [#allocation2], 20
    %v639 = vld [vmem:[%s638] sm:$0xf]
    %640 = vst [vmem:[#allocation1] ss:$4 sm:$0xff] %v555
    %v641 = vld.sshfl [vmem:[#allocation1] sm:$0xff pattern:$0x73625140]
    %642 = vrot.lane.b32.xlu0 %v641, 32
    %v643 = vpop.permute.xlu0 %642
    %v644 = vsel %vm280, %v643, 0
    %646 = vmatpush.msra.mxu0 0.0
    %647 = vmatpush.msra.mxu0 0.0
    %648 = vmatpush.msra.mxu0 0.0
    %649 = vmatpush.msra.mxu0 0.0
    %650 = vmatpush.msra.mxu0 0.0
    %651 = vmatpush.msra.mxu0 0.0
    %652 = vmatpush.msra.mxu0 0.0
    %653 = vmatpush.msra.mxu0 0.0
    %654 = vmatpush.msra.mxu0 0.0
    %655 = vmatpush.msra.mxu0 0.0
    %656 = vmatpush.msra.mxu0 0.0
    %657 = vmatpush.msra.mxu0 0.0
    %658 = vmatpush.msra.mxu0 %v278
    %659 = vmatpush.msra.mxu0 %v277
    %660 = vmatpush.msra.mxu0 %v276
    %661 = vmatpush.msra.mxu0 %v275
    %662 = vmatmul.f32.gmra.mxu0 %v644
    %v663 = vpop.f32.mrf.mxu0
    %v664 = vadd.f32 0.0, %v663
    %665 = vdwg.mxu0
    %v667 = vrot.slane %v639, 2
    %v669 = vadd.f32 %v667, %v664
    %v670 = vxor.u32 %v669, 2147483648
    %v671 = vmul.f32 %v670, 1.442695
    %v672 = vpow.pop %v671
    %v673 = vadd.f32 %v672, 1.0
    %v674 = vrcp.pop %v673
    %v675 = vmul.f32 %v673, %v674
    %v676 = vsub.f32 1.0, %v675
    %v677 = vmul.f32 %v674, %v676
    %v678 = vadd.f32 %v674, %v677
    %vm679 = vweird.f32 %v673
    %vm680 = vweird.f32 %v674
    %vm681 = vmor %vm679, %vm680
    %v682 = vsel %vm681, %v674, %v678
    %v683 = vand.u32 2147483647, %v673
    %vm684 = vcmp.eq.f32.partialorder %v683, 8.507059e+37
    %v685 = vand.u32 %v673, 2147483648
    %v686 = vor.u32 1.1754944e-38, %v685
    %v687 = vsel %vm684, %v686, %v682
    %v688 = vmul.f32 1.0, %v687
    %v689 = vtanh.pop %v669
    %v690 = vmul.f32 %v688, %v549
    %692 = vrot.lane.b32.xlu0 %v689, 64
    %v693 = vpop.permute.xlu0 %692
    %v695 = vmul.f32 %v688, %v693
    %697 = vrot.lane.b32.xlu0 %v695, 32
    %v698 = vpop.permute.xlu0 %697
    %v700 = vadd.f32 %v690, %v698
    %v701 = vtanh.pop %v700
    %703 = vrot.lane.b32.xlu0 %v701, 64
    %v704 = vpop.permute.xlu0 %703
    %v706 = vmul.f32 %v688, %v704
    %708 = vst [vmem:[#allocation1] ss:$4 sm:$0xff] %v637
    %v709 = vld.sshfl [vmem:[#allocation1] sm:$0xff pattern:$0x73625140]
    %710 = vrot.lane.b32.xlu0 %v709, 32
    %v711 = vpop.permute.xlu0 %710
    %s713 = scalar_lea.vmem [#allocation3], 4
    %714 = vst.msk [vmem:[%s713] sm:$0x3] %vm411, %v711
    %716 = vst [vmem:[#allocation1] ss:$4 sm:$0xff] %v706
    %v717 = vld.sshfl [vmem:[#allocation1] sm:$0xff pattern:$0x73625140]
    %718 = vrot.lane.b32.xlu0 %v717, 32
    %v719 = vpop.permute.xlu0 %718
    %s721 = scalar_lea.vmem [#allocation4], 10
    %722 = vst.msk [vmem:[%s721] sm:$0x3] %vm411, %v719
    %s723 = scalar_lea.vmem [#allocation2], 12
    %v724 = vld [vmem:[%s723] sm:$0xf]
    %725 = vst [vmem:[#allocation1] ss:$4 sm:$0xff] %v637
    %v726 = vld.sshfl [vmem:[#allocation1] sm:$0xff pattern:$0x73625140]
    %727 = vrot.lane.b32.xlu0 %v726, 32
    %v728 = vpop.permute.xlu0 %727
    %v729 = vsel %vm280, %v728, 0
    %731 = vmatpush.msra.mxu0 0.0
    %732 = vmatpush.msra.mxu0 0.0
    %733 = vmatpush.msra.mxu0 0.0
    %734 = vmatpush.msra.mxu0 0.0
    %735 = vmatpush.msra.mxu0 0.0
    %736 = vmatpush.msra.mxu0 0.0
    %737 = vmatpush.msra.mxu0 0.0
    %738 = vmatpush.msra.mxu0 0.0
    %739 = vmatpush.msra.mxu0 0.0
    %740 = vmatpush.msra.mxu0 0.0
    %741 = vmatpush.msra.mxu0 0.0
    %742 = vmatpush.msra.mxu0 0.0
    %743 = vmatpush.msra.mxu0 %v274
    %744 = vmatpush.msra.mxu0 %v273
    %745 = vmatpush.msra.mxu0 %v272
    %746 = vmatpush.msra.mxu0 %v271
    %747 = vmatmul.f32.gmra.mxu0 %v729
    %v748 = vpop.f32.mrf.mxu0
    %v749 = vadd.f32 0.0, %v748
    %750 = vdwg.mxu0
    %v751 = vadd.f32 %v724, %v749
    %v752 = vxor.u32 %v751, 2147483648
    %v753 = vmul.f32 %v752, 1.442695
    %v754 = vpow.pop %v753
    %v755 = vadd.f32 %v754, 1.0
    %v756 = vrcp.pop %v755
    %v757 = vmul.f32 %v755, %v756
    %v758 = vsub.f32 1.0, %v757
    %v759 = vmul.f32 %v756, %v758
    %v760 = vadd.f32 %v756, %v759
    %vm761 = vweird.f32 %v755
    %vm762 = vweird.f32 %v756
    %vm763 = vmor %vm761, %vm762
    %v764 = vsel %vm763, %v756, %v760
    %v765 = vand.u32 2147483647, %v755
    %vm766 = vcmp.eq.f32.partialorder %v765, 8.507059e+37
    %v767 = vand.u32 %v755, 2147483648
    %v768 = vor.u32 1.1754944e-38, %v767
    %v769 = vsel %vm766, %v768, %v764
    %v770 = vmul.f32 1.0, %v769
    %v771 = vtanh.pop %v751
    %v772 = vmul.f32 %v770, %v631
    %774 = vrot.lane.b32.xlu0 %v771, 64
    %v775 = vpop.permute.xlu0 %774
    %v777 = vmul.f32 %v770, %v775
    %779 = vrot.lane.b32.xlu0 %v777, 32
    %v780 = vpop.permute.xlu0 %779
    %v782 = vadd.f32 %v772, %v780
    %v783 = vtanh.pop %v782
    %785 = vrot.lane.b32.xlu0 %v783, 64
    %v786 = vpop.permute.xlu0 %785
    %v788 = vmul.f32 %v770, %v786
    %s789 = scalar_lea.vmem [#allocation2], 16
    %v790 = vld [vmem:[%s789] sm:$0xf]
    %791 = vst [vmem:[#allocation1] ss:$4 sm:$0xff] %v706
    %v792 = vld.sshfl [vmem:[#allocation1] sm:$0xff pattern:$0x73625140]
    %793 = vrot.lane.b32.xlu0 %v792, 32
    %v794 = vpop.permute.xlu0 %793
    %v795 = vsel %vm280, %v794, 0
    %797 = vmatpush.msra.mxu0 0.0
    %798 = vmatpush.msra.mxu0 0.0
    %799 = vmatpush.msra.mxu0 0.0
    %800 = vmatpush.msra.mxu0 0.0
    %801 = vmatpush.msra.mxu0 0.0
    %802 = vmatpush.msra.mxu0 0.0
    %803 = vmatpush.msra.mxu0 0.0
    %804 = vmatpush.msra.mxu0 0.0
    %805 = vmatpush.msra.mxu0 0.0
    %806 = vmatpush.msra.mxu0 0.0
    %807 = vmatpush.msra.mxu0 0.0
    %808 = vmatpush.msra.mxu0 0.0
    %809 = vmatpush.msra.mxu0 %v278
    %810 = vmatpush.msra.mxu0 %v277
    %811 = vmatpush.msra.mxu0 %v276
    %812 = vmatpush.msra.mxu0 %v275
    %813 = vmatmul.f32.gmra.mxu0 %v795
    %v814 = vpop.f32.mrf.mxu0
    %v815 = vadd.f32 0.0, %v814
    %816 = vdwg.mxu0
    %v818 = vrot.slane %v790, 2
    %v820 = vadd.f32 %v818, %v815
    %v821 = vxor.u32 %v820, 2147483648
    %v822 = vmul.f32 %v821, 1.442695
    %v823 = vpow.pop %v822
    %v824 = vadd.f32 %v823, 1.0
    %v825 = vrcp.pop %v824
    %v826 = vmul.f32 %v824, %v825
    %v827 = vsub.f32 1.0, %v826
    %v828 = vmul.f32 %v825, %v827
    %v829 = vadd.f32 %v825, %v828
    %vm830 = vweird.f32 %v824
    %vm831 = vweird.f32 %v825
    %vm832 = vmor %vm830, %vm831
    %v833 = vsel %vm832, %v825, %v829
    %v834 = vand.u32 2147483647, %v824
    %vm835 = vcmp.eq.f32.partialorder %v834, 8.507059e+37
    %v836 = vand.u32 %v824, 2147483648
    %v837 = vor.u32 1.1754944e-38, %v836
    %v838 = vsel %vm835, %v837, %v833
    %v839 = vmul.f32 1.0, %v838
    %v840 = vtanh.pop %v820
    %v841 = vmul.f32 %v839, %v700
    %843 = vrot.lane.b32.xlu0 %v840, 64
    %v844 = vpop.permute.xlu0 %843
    %v846 = vmul.f32 %v839, %v844
    %848 = vrot.lane.b32.xlu0 %v846, 32
    %v849 = vpop.permute.xlu0 %848
    %v851 = vadd.f32 %v841, %v849
    %v852 = vtanh.pop %v851
    %854 = vrot.lane.b32.xlu0 %v852, 64
    %v855 = vpop.permute.xlu0 %854
    %v857 = vmul.f32 %v839, %v855
    %859 = vst [vmem:[#allocation1] ss:$4 sm:$0xff] %v788
    %v860 = vld.sshfl [vmem:[#allocation1] sm:$0xff pattern:$0x73625140]
    %861 = vrot.lane.b32.xlu0 %v860, 32
    %v862 = vpop.permute.xlu0 %861
    %s864 = scalar_lea.vmem [#allocation3], 6
    %865 = vst.msk [vmem:[%s864] sm:$0x3] %vm411, %v862
    %867 = vst [vmem:[#allocation1] ss:$4 sm:$0xff] %v857
    %v868 = vld.sshfl [vmem:[#allocation1] sm:$0xff pattern:$0x73625140]
    %869 = vrot.lane.b32.xlu0 %v868, 32
    %v870 = vpop.permute.xlu0 %869
    %s872 = scalar_lea.vmem [#allocation4], 8
    %873 = vst.msk [vmem:[%s872] sm:$0x3] %vm411, %v870
    %v874 = vld [vmem:[%s789] sm:$0xf]
    %875 = vst [vmem:[#allocation1] ss:$4 sm:$0xff] %v788
    %v876 = vld.sshfl [vmem:[#allocation1] sm:$0xff pattern:$0x73625140]
    %877 = vrot.lane.b32.xlu0 %v876, 32
    %v878 = vpop.permute.xlu0 %877
    %v879 = vsel %vm280, %v878, 0
    %881 = vmatpush.msra.mxu0 0.0
    %882 = vmatpush.msra.mxu0 0.0
    %883 = vmatpush.msra.mxu0 0.0
    %884 = vmatpush.msra.mxu0 0.0
    %885 = vmatpush.msra.mxu0 0.0
    %886 = vmatpush.msra.mxu0 0.0
    %887 = vmatpush.msra.mxu0 0.0
    %888 = vmatpush.msra.mxu0 0.0
    %889 = vmatpush.msra.mxu0 0.0
    %890 = vmatpush.msra.mxu0 0.0
    %891 = vmatpush.msra.mxu0 0.0
    %892 = vmatpush.msra.mxu0 0.0
    %893 = vmatpush.msra.mxu0 %v274
    %894 = vmatpush.msra.mxu0 %v273
    %895 = vmatpush.msra.mxu0 %v272
    %896 = vmatpush.msra.mxu0 %v271
    %897 = vmatmul.f32.gmra.mxu0 %v879
    %v898 = vpop.f32.mrf.mxu0
    %v899 = vadd.f32 0.0, %v898
    %900 = vdwg.mxu0
    %v901 = vadd.f32 %v874, %v899
    %v902 = vxor.u32 %v901, 2147483648
    %v903 = vmul.f32 %v902, 1.442695
    %v904 = vpow.pop %v903
    %v905 = vadd.f32 %v904, 1.0
    %v906 = vrcp.pop %v905
    %v907 = vmul.f32 %v905, %v906
    %v908 = vsub.f32 1.0, %v907
    %v909 = vmul.f32 %v906, %v908
    %v910 = vadd.f32 %v906, %v909
    %vm911 = vweird.f32 %v905
    %vm912 = vweird.f32 %v906
    %vm913 = vmor %vm911, %vm912
    %v914 = vsel %vm913, %v906, %v910
    %v915 = vand.u32 2147483647, %v905
    %vm916 = vcmp.eq.f32.partialorder %v915, 8.507059e+37
    %v917 = vand.u32 %v905, 2147483648
    %v918 = vor.u32 1.1754944e-38, %v917
    %v919 = vsel %vm916, %v918, %v914
    %v920 = vmul.f32 1.0, %v919
    %v921 = vtanh.pop %v901
    %v922 = vmul.f32 %v920, %v782
    %924 = vrot.lane.b32.xlu0 %v921, 64
    %v925 = vpop.permute.xlu0 %924
    %v927 = vmul.f32 %v920, %v925
    %929 = vrot.lane.b32.xlu0 %v927, 32
    %v930 = vpop.permute.xlu0 %929
    %v932 = vadd.f32 %v922, %v930
    %v933 = vtanh.pop %v932
    %935 = vrot.lane.b32.xlu0 %v933, 64
    %v936 = vpop.permute.xlu0 %935
    %v938 = vmul.f32 %v920, %v936
    %v939 = vld [vmem:[%s723] sm:$0xf]
    %940 = vst [vmem:[#allocation1] ss:$4 sm:$0xff] %v857
    %v941 = vld.sshfl [vmem:[#allocation1] sm:$0xff pattern:$0x73625140]
    %942 = vrot.lane.b32.xlu0 %v941, 32
    %v943 = vpop.permute.xlu0 %942
    %v944 = vsel %vm280, %v943, 0
    %946 = vmatpush.msra.mxu0 0.0
    %947 = vmatpush.msra.mxu0 0.0
    %948 = vmatpush.msra.mxu0 0.0
    %949 = vmatpush.msra.mxu0 0.0
    %950 = vmatpush.msra.mxu0 0.0
    %951 = vmatpush.msra.mxu0 0.0
    %952 = vmatpush.msra.mxu0 0.0
    %953 = vmatpush.msra.mxu0 0.0
    %954 = vmatpush.msra.mxu0 0.0
    %955 = vmatpush.msra.mxu0 0.0
    %956 = vmatpush.msra.mxu0 0.0
    %957 = vmatpush.msra.mxu0 0.0
    %958 = vmatpush.msra.mxu0 %v278
    %959 = vmatpush.msra.mxu0 %v277
    %960 = vmatpush.msra.mxu0 %v276
    %961 = vmatpush.msra.mxu0 %v275
    %962 = vmatmul.f32.gmra.mxu0 %v944
    %v963 = vpop.f32.mrf.mxu0
    %v964 = vadd.f32 0.0, %v963
    %965 = vdwg.mxu0
    %v967 = vrot.slane %v939, 2
    %v969 = vadd.f32 %v967, %v964
    %v970 = vxor.u32 %v969, 2147483648
    %v971 = vmul.f32 %v970, 1.442695
    %v972 = vpow.pop %v971
    %v973 = vadd.f32 %v972, 1.0
    %v974 = vrcp.pop %v973
    %v975 = vmul.f32 %v973, %v974
    %v976 = vsub.f32 1.0, %v975
    %v977 = vmul.f32 %v974, %v976
    %v978 = vadd.f32 %v974, %v977
    %vm979 = vweird.f32 %v973
    %vm980 = vweird.f32 %v974
    %vm981 = vmor %vm979, %vm980
    %v982 = vsel %vm981, %v974, %v978
    %v983 = vand.u32 2147483647, %v973
    %vm984 = vcmp.eq.f32.partialorder %v983, 8.507059e+37
    %v985 = vand.u32 %v973, 2147483648
    %v986 = vor.u32 1.1754944e-38, %v985
    %v987 = vsel %vm984, %v986, %v982
    %v988 = vmul.f32 1.0, %v987
    %v989 = vtanh.pop %v969
    %v990 = vmul.f32 %v988, %v851
    %992 = vrot.lane.b32.xlu0 %v989, 64
    %v993 = vpop.permute.xlu0 %992
    %v995 = vmul.f32 %v988, %v993
    %997 = vrot.lane.b32.xlu0 %v995, 32
    %v998 = vpop.permute.xlu0 %997
    %v1000 = vadd.f32 %v990, %v998
    %v1001 = vtanh.pop %v1000
    %1003 = vrot.lane.b32.xlu0 %v1001, 64
    %v1004 = vpop.permute.xlu0 %1003
    %v1006 = vmul.f32 %v988, %v1004
    %1008 = vst [vmem:[#allocation1] ss:$4 sm:$0xff] %v938
    %v1009 = vld.sshfl [vmem:[#allocation1] sm:$0xff pattern:$0x73625140]
    %1010 = vrot.lane.b32.xlu0 %v1009, 32
    %v1011 = vpop.permute.xlu0 %1010
    %s1013 = scalar_lea.vmem [#allocation3], 8
    %1014 = vst.msk [vmem:[%s1013] sm:$0x3] %vm411, %v1011
    %1016 = vst [vmem:[#allocation1] ss:$4 sm:$0xff] %v1006
    %v1017 = vld.sshfl [vmem:[#allocation1] sm:$0xff pattern:$0x73625140]
    %1018 = vrot.lane.b32.xlu0 %v1017, 32
    %v1019 = vpop.permute.xlu0 %1018
    %s1021 = scalar_lea.vmem [#allocation4], 6
    %1022 = vst.msk [vmem:[%s1021] sm:$0x3] %vm411, %v1019
    %v1023 = vld [vmem:[%s638] sm:$0xf]
    %1024 = vst [vmem:[#allocation1] ss:$4 sm:$0xff] %v938
    %v1025 = vld.sshfl [vmem:[#allocation1] sm:$0xff pattern:$0x73625140]
    %1026 = vrot.lane.b32.xlu0 %v1025, 32
    %v1027 = vpop.permute.xlu0 %1026
    %v1028 = vsel %vm280, %v1027, 0
    %1030 = vmatpush.msra.mxu0 0.0
    %1031 = vmatpush.msra.mxu0 0.0
    %1032 = vmatpush.msra.mxu0 0.0
    %1033 = vmatpush.msra.mxu0 0.0
    %1034 = vmatpush.msra.mxu0 0.0
    %1035 = vmatpush.msra.mxu0 0.0
    %1036 = vmatpush.msra.mxu0 0.0
    %1037 = vmatpush.msra.mxu0 0.0
    %1038 = vmatpush.msra.mxu0 0.0
    %1039 = vmatpush.msra.mxu0 0.0
    %1040 = vmatpush.msra.mxu0 0.0
    %1041 = vmatpush.msra.mxu0 0.0
    %1042 = vmatpush.msra.mxu0 %v274
    %1043 = vmatpush.msra.mxu0 %v273
    %1044 = vmatpush.msra.mxu0 %v272
    %1045 = vmatpush.msra.mxu0 %v271
    %1046 = vmatmul.f32.gmra.mxu0 %v1028
    %v1047 = vpop.f32.mrf.mxu0
    %v1048 = vadd.f32 0.0, %v1047
    %1049 = vdwg.mxu0
    %v1050 = vadd.f32 %v1023, %v1048
    %v1051 = vxor.u32 %v1050, 2147483648
    %v1052 = vmul.f32 %v1051, 1.442695
    %v1053 = vpow.pop %v1052
    %v1054 = vadd.f32 %v1053, 1.0
    %v1055 = vrcp.pop %v1054
    %v1056 = vmul.f32 %v1054, %v1055
    %v1057 = vsub.f32 1.0, %v1056
    %v1058 = vmul.f32 %v1055, %v1057
    %v1059 = vadd.f32 %v1055, %v1058
    %vm1060 = vweird.f32 %v1054
    %vm1061 = vweird.f32 %v1055
    %vm1062 = vmor %vm1060, %vm1061
    %v1063 = vsel %vm1062, %v1055, %v1059
    %v1064 = vand.u32 2147483647, %v1054
    %vm1065 = vcmp.eq.f32.partialorder %v1064, 8.507059e+37
    %v1066 = vand.u32 %v1054, 2147483648
    %v1067 = vor.u32 1.1754944e-38, %v1066
    %v1068 = vsel %vm1065, %v1067, %v1063
    %v1069 = vmul.f32 1.0, %v1068
    %v1070 = vtanh.pop %v1050
    %v1071 = vmul.f32 %v1069, %v932
    %1073 = vrot.lane.b32.xlu0 %v1070, 64
    %v1074 = vpop.permute.xlu0 %1073
    %v1076 = vmul.f32 %v1069, %v1074
    %1078 = vrot.lane.b32.xlu0 %v1076, 32
    %v1079 = vpop.permute.xlu0 %1078
    %v1081 = vadd.f32 %v1071, %v1079
    %v1082 = vtanh.pop %v1081
    %1084 = vrot.lane.b32.xlu0 %v1082, 64
    %v1085 = vpop.permute.xlu0 %1084
    %v1087 = vmul.f32 %v1069, %v1085
    %v1088 = vld [vmem:[%s572] sm:$0xf]
    %1089 = vst [vmem:[#allocation1] ss:$4 sm:$0xff] %v1006
    %v1090 = vld.sshfl [vmem:[#allocation1] sm:$0xff pattern:$0x73625140]
    %1091 = vrot.lane.b32.xlu0 %v1090, 32
    %v1092 = vpop.permute.xlu0 %1091
    %v1093 = vsel %vm280, %v1092, 0
    %1095 = vmatpush.msra.mxu0 0.0
    %1096 = vmatpush.msra.mxu0 0.0
    %1097 = vmatpush.msra.mxu0 0.0
    %1098 = vmatpush.msra.mxu0 0.0
    %1099 = vmatpush.msra.mxu0 0.0
    %1100 = vmatpush.msra.mxu0 0.0
    %1101 = vmatpush.msra.mxu0 0.0
    %1102 = vmatpush.msra.mxu0 0.0
    %1103 = vmatpush.msra.mxu0 0.0
    %1104 = vmatpush.msra.mxu0 0.0
    %1105 = vmatpush.msra.mxu0 0.0
    %1106 = vmatpush.msra.mxu0 0.0
    %1107 = vmatpush.msra.mxu0 %v278
    %1108 = vmatpush.msra.mxu0 %v277
    %1109 = vmatpush.msra.mxu0 %v276
    %1110 = vmatpush.msra.mxu0 %v275
    %1111 = vmatmul.f32.gmra.mxu0 %v1093
    %v1112 = vpop.f32.mrf.mxu0
    %v1113 = vadd.f32 0.0, %v1112
    %1114 = vdwg.mxu0
    %v1116 = vrot.slane %v1088, 2
    %v1118 = vadd.f32 %v1116, %v1113
    %v1119 = vxor.u32 %v1118, 2147483648
    %v1120 = vmul.f32 %v1119, 1.442695
    %v1121 = vpow.pop %v1120
    %v1122 = vadd.f32 %v1121, 1.0
    %v1123 = vrcp.pop %v1122
    %v1124 = vmul.f32 %v1122, %v1123
    %v1125 = vsub.f32 1.0, %v1124
    %v1126 = vmul.f32 %v1123, %v1125
    %v1127 = vadd.f32 %v1123, %v1126
    %vm1128 = vweird.f32 %v1122
    %vm1129 = vweird.f32 %v1123
    %vm1130 = vmor %vm1128, %vm1129
    %v1131 = vsel %vm1130, %v1123, %v1127
    %v1132 = vand.u32 2147483647, %v1122
    %vm1133 = vcmp.eq.f32.partialorder %v1132, 8.507059e+37
    %v1134 = vand.u32 %v1122, 2147483648
    %v1135 = vor.u32 1.1754944e-38, %v1134
    %v1136 = vsel %vm1133, %v1135, %v1131
    %v1137 = vmul.f32 1.0, %v1136
    %v1138 = vtanh.pop %v1118
    %v1139 = vmul.f32 %v1137, %v1000
    %1141 = vrot.lane.b32.xlu0 %v1138, 64
    %v1142 = vpop.permute.xlu0 %1141
    %v1144 = vmul.f32 %v1137, %v1142
    %1146 = vrot.lane.b32.xlu0 %v1144, 32
    %v1147 = vpop.permute.xlu0 %1146
    %v1149 = vadd.f32 %v1139, %v1147
    %v1150 = vtanh.pop %v1149
    %1152 = vrot.lane.b32.xlu0 %v1150, 64
    %v1153 = vpop.permute.xlu0 %1152
    %v1155 = vmul.f32 %v1137, %v1153
    %1157 = vst [vmem:[#allocation1] ss:$4 sm:$0xff] %v1087
    %v1158 = vld.sshfl [vmem:[#allocation1] sm:$0xff pattern:$0x73625140]
    %1159 = vrot.lane.b32.xlu0 %v1158, 32
    %v1160 = vpop.permute.xlu0 %1159
    %s1162 = scalar_lea.vmem [#allocation3], 10
    %1163 = vst.msk [vmem:[%s1162] sm:$0x3] %vm411, %v1160
    %1165 = vst [vmem:[#allocation1] ss:$4 sm:$0xff] %v1155
    %v1166 = vld.sshfl [vmem:[#allocation1] sm:$0xff pattern:$0x73625140]
    %1167 = vrot.lane.b32.xlu0 %v1166, 32
    %v1168 = vpop.permute.xlu0 %1167
    %s1170 = scalar_lea.vmem [#allocation4], 4
    %1171 = vst.msk [vmem:[%s1170] sm:$0x3] %vm411, %v1168
    %v1172 = vld [vmem:[%s487] sm:$0xf]
    %1173 = vst [vmem:[#allocation1] ss:$4 sm:$0xff] %v1087
    %v1174 = vld.sshfl [vmem:[#allocation1] sm:$0xff pattern:$0x73625140]
    %1175 = vrot.lane.b32.xlu0 %v1174, 32
    %v1176 = vpop.permute.xlu0 %1175
    %v1177 = vsel %vm280, %v1176, 0
    %1179 = vmatpush.msra.mxu0 0.0
    %1180 = vmatpush.msra.mxu0 0.0
    %1181 = vmatpush.msra.mxu0 0.0
    %1182 = vmatpush.msra.mxu0 0.0
    %1183 = vmatpush.msra.mxu0 0.0
    %1184 = vmatpush.msra.mxu0 0.0
    %1185 = vmatpush.msra.mxu0 0.0
    %1186 = vmatpush.msra.mxu0 0.0
    %1187 = vmatpush.msra.mxu0 0.0
    %1188 = vmatpush.msra.mxu0 0.0
    %1189 = vmatpush.msra.mxu0 0.0
    %1190 = vmatpush.msra.mxu0 0.0
    %1191 = vmatpush.msra.mxu0 %v274
    %1192 = vmatpush.msra.mxu0 %v273
    %1193 = vmatpush.msra.mxu0 %v272
    %1194 = vmatpush.msra.mxu0 %v271
    %1195 = vmatmul.f32.gmra.mxu0 %v1177
    %v1196 = vpop.f32.mrf.mxu0
    %v1197 = vadd.f32 0.0, %v1196
    %1198 = vdwg.mxu0
    %v1199 = vadd.f32 %v1172, %v1197
    %v1200 = vxor.u32 %v1199, 2147483648
    %v1201 = vmul.f32 %v1200, 1.442695
    %v1202 = vpow.pop %v1201
    %v1203 = vadd.f32 %v1202, 1.0
    %v1204 = vrcp.pop %v1203
    %v1205 = vmul.f32 %v1203, %v1204
    %v1206 = vsub.f32 1.0, %v1205
    %v1207 = vmul.f32 %v1204, %v1206
    %v1208 = vadd.f32 %v1204, %v1207
    %vm1209 = vweird.f32 %v1203
    %vm1210 = vweird.f32 %v1204
    %vm1211 = vmor %vm1209, %vm1210
    %v1212 = vsel %vm1211, %v1204, %v1208
    %v1213 = vand.u32 2147483647, %v1203
    %vm1214 = vcmp.eq.f32.partialorder %v1213, 8.507059e+37
    %v1215 = vand.u32 %v1203, 2147483648
    %v1216 = vor.u32 1.1754944e-38, %v1215
    %v1217 = vsel %vm1214, %v1216, %v1212
    %v1218 = vmul.f32 1.0, %v1217
    %v1219 = vtanh.pop %v1199
    %v1220 = vmul.f32 %v1218, %v1081
    %1222 = vrot.lane.b32.xlu0 %v1219, 64
    %v1223 = vpop.permute.xlu0 %1222
    %v1225 = vmul.f32 %v1218, %v1223
    %1227 = vrot.lane.b32.xlu0 %v1225, 32
    %v1228 = vpop.permute.xlu0 %1227
    %v1230 = vadd.f32 %v1220, %v1228
    %v1231 = vtanh.pop %v1230
    %1233 = vrot.lane.b32.xlu0 %v1231, 64
    %v1234 = vpop.permute.xlu0 %1233
    %v1236 = vmul.f32 %v1218, %v1234
    %v1237 = vld [vmem:[%s421] sm:$0xf]
    %1238 = vst [vmem:[#allocation1] ss:$4 sm:$0xff] %v1155
    %v1239 = vld.sshfl [vmem:[#allocation1] sm:$0xff pattern:$0x73625140]
    %1240 = vrot.lane.b32.xlu0 %v1239, 32
    %v1241 = vpop.permute.xlu0 %1240
    %v1242 = vsel %vm280, %v1241, 0
    %1244 = vmatpush.msra.mxu0 0.0
    %1245 = vmatpush.msra.mxu0 0.0
    %1246 = vmatpush.msra.mxu0 0.0
    %1247 = vmatpush.msra.mxu0 0.0
    %1248 = vmatpush.msra.mxu0 0.0
    %1249 = vmatpush.msra.mxu0 0.0
    %1250 = vmatpush.msra.mxu0 0.0
    %1251 = vmatpush.msra.mxu0 0.0
    %1252 = vmatpush.msra.mxu0 0.0
    %1253 = vmatpush.msra.mxu0 0.0
    %1254 = vmatpush.msra.mxu0 0.0
    %1255 = vmatpush.msra.mxu0 0.0
    %1256 = vmatpush.msra.mxu0 %v278
    %1257 = vmatpush.msra.mxu0 %v277
    %1258 = vmatpush.msra.mxu0 %v276
    %1259 = vmatpush.msra.mxu0 %v275
    %1260 = vmatmul.f32.gmra.mxu0 %v1242
    %v1261 = vpop.f32.mrf.mxu0
    %v1262 = vadd.f32 0.0, %v1261
    %1263 = vdwg.mxu0
    %v1265 = vrot.slane %v1237, 2
    %v1267 = vadd.f32 %v1265, %v1262
    %v1268 = vxor.u32 %v1267, 2147483648
    %v1269 = vmul.f32 %v1268, 1.442695
    %v1270 = vpow.pop %v1269
    %v1271 = vadd.f32 %v1270, 1.0
    %v1272 = vrcp.pop %v1271
    %v1273 = vmul.f32 %v1271, %v1272
    %v1274 = vsub.f32 1.0, %v1273
    %v1275 = vmul.f32 %v1272, %v1274
    %v1276 = vadd.f32 %v1272, %v1275
    %vm1277 = vweird.f32 %v1271
    %vm1278 = vweird.f32 %v1272
    %vm1279 = vmor %vm1277, %vm1278
    %v1280 = vsel %vm1279, %v1272, %v1276
    %v1281 = vand.u32 2147483647, %v1271
    %vm1282 = vcmp.eq.f32.partialorder %v1281, 8.507059e+37
    %v1283 = vand.u32 %v1271, 2147483648
    %v1284 = vor.u32 1.1754944e-38, %v1283
    %v1285 = vsel %vm1282, %v1284, %v1280
    %v1286 = vmul.f32 1.0, %v1285
    %v1287 = vtanh.pop %v1267
    %v1288 = vmul.f32 %v1286, %v1149
    %1290 = vrot.lane.b32.xlu0 %v1287, 64
    %v1291 = vpop.permute.xlu0 %1290
    %v1293 = vmul.f32 %v1286, %v1291
    %1295 = vrot.lane.b32.xlu0 %v1293, 32
    %v1296 = vpop.permute.xlu0 %1295
    %v1298 = vadd.f32 %v1288, %v1296
    %v1299 = vtanh.pop %v1298
    %1301 = vrot.lane.b32.xlu0 %v1299, 64
    %v1302 = vpop.permute.xlu0 %1301
    %v1304 = vmul.f32 %v1286, %v1302
    %1306 = vst [vmem:[#allocation1] ss:$4 sm:$0xff] %v1236
    %v1307 = vld.sshfl [vmem:[#allocation1] sm:$0xff pattern:$0x73625140]
    %1308 = vrot.lane.b32.xlu0 %v1307, 32
    %v1309 = vpop.permute.xlu0 %1308
    %s1311 = scalar_lea.vmem [#allocation3], 12
    %1312 = vst.msk [vmem:[%s1311] sm:$0x3] %vm411, %v1309
    %1314 = vst [vmem:[#allocation1] ss:$4 sm:$0xff] %v1304
    %v1315 = vld.sshfl [vmem:[#allocation1] sm:$0xff pattern:$0x73625140]
    %1316 = vrot.lane.b32.xlu0 %v1315, 32
    %v1317 = vpop.permute.xlu0 %1316
    %s1319 = scalar_lea.vmem [#allocation4], 2
    %1320 = vst.msk [vmem:[%s1319] sm:$0x3] %vm411, %v1317
    %v1321 = vld [vmem:[%s342] sm:$0xf]
    %1322 = vst [vmem:[#allocation1] ss:$4 sm:$0xff] %v1236
    %v1323 = vld.sshfl [vmem:[#allocation1] sm:$0xff pattern:$0x73625140]
    %1324 = vrot.lane.b32.xlu0 %v1323, 32
    %v1325 = vpop.permute.xlu0 %1324
    %v1326 = vsel %vm280, %v1325, 0
    %1328 = vmatpush.msra.mxu0 0.0
    %1329 = vmatpush.msra.mxu0 0.0
    %1330 = vmatpush.msra.mxu0 0.0
    %1331 = vmatpush.msra.mxu0 0.0
    %1332 = vmatpush.msra.mxu0 0.0
    %1333 = vmatpush.msra.mxu0 0.0
    %1334 = vmatpush.msra.mxu0 0.0
    %1335 = vmatpush.msra.mxu0 0.0
    %1336 = vmatpush.msra.mxu0 0.0
    %1337 = vmatpush.msra.mxu0 0.0
    %1338 = vmatpush.msra.mxu0 0.0
    %1339 = vmatpush.msra.mxu0 0.0
    %1340 = vmatpush.msra.mxu0 %v274
    %1341 = vmatpush.msra.mxu0 %v273
    %1342 = vmatpush.msra.mxu0 %v272
    %1343 = vmatpush.msra.mxu0 %v271
    %1344 = vmatmul.f32.gmra.mxu0 %v1326
    %v1345 = vpop.f32.mrf.mxu0
    %v1346 = vadd.f32 0.0, %v1345
    %1347 = vdwg.mxu0
    %v1348 = vadd.f32 %v1321, %v1346
    %v1349 = vxor.u32 %v1348, 2147483648
    %v1350 = vmul.f32 %v1349, 1.442695
    %v1351 = vpow.pop %v1350
    %v1352 = vadd.f32 %v1351, 1.0
    %v1353 = vrcp.pop %v1352
    %v1354 = vmul.f32 %v1352, %v1353
    %v1355 = vsub.f32 1.0, %v1354
    %v1356 = vmul.f32 %v1353, %v1355
    %v1357 = vadd.f32 %v1353, %v1356
    %vm1358 = vweird.f32 %v1352
    %vm1359 = vweird.f32 %v1353
    %vm1360 = vmor %vm1358, %vm1359
    %v1361 = vsel %vm1360, %v1353, %v1357
    %v1362 = vand.u32 2147483647, %v1352
    %vm1363 = vcmp.eq.f32.partialorder %v1362, 8.507059e+37
    %v1364 = vand.u32 %v1352, 2147483648
    %v1365 = vor.u32 1.1754944e-38, %v1364
    %v1366 = vsel %vm1363, %v1365, %v1361
    %v1367 = vmul.f32 1.0, %v1366
    %v1368 = vtanh.pop %v1348
    %v1369 = vmul.f32 %v1367, %v1230
    %1371 = vrot.lane.b32.xlu0 %v1368, 64
    %v1372 = vpop.permute.xlu0 %1371
    %v1374 = vmul.f32 %v1367, %v1372
    %1376 = vrot.lane.b32.xlu0 %v1374, 32
    %v1377 = vpop.permute.xlu0 %1376
    %v1379 = vadd.f32 %v1369, %v1377
    %v1380 = vtanh.pop %v1379
    %1382 = vrot.lane.b32.xlu0 %v1380, 64
    %v1383 = vpop.permute.xlu0 %1382
    %v1385 = vmul.f32 %v1367, %v1383
    %v1386 = vld [vmem:[#allocation2] sm:$0xf]
    %1387 = vst [vmem:[#allocation1] ss:$4 sm:$0xff] %v1304
    %v1388 = vld.sshfl [vmem:[#allocation1] sm:$0xff pattern:$0x73625140]
    %1389 = vrot.lane.b32.xlu0 %v1388, 32
    %v1390 = vpop.permute.xlu0 %1389
    %v1391 = vsel %vm280, %v1390, 0
    %1393 = vmatpush.msra.mxu0 0.0
    %1394 = vmatpush.msra.mxu0 0.0
    %1395 = vmatpush.msra.mxu0 0.0
    %1396 = vmatpush.msra.mxu0 0.0
    %1397 = vmatpush.msra.mxu0 0.0
    %1398 = vmatpush.msra.mxu0 0.0
    %1399 = vmatpush.msra.mxu0 0.0
    %1400 = vmatpush.msra.mxu0 0.0
    %1401 = vmatpush.msra.mxu0 0.0
    %1402 = vmatpush.msra.mxu0 0.0
    %1403 = vmatpush.msra.mxu0 0.0
    %1404 = vmatpush.msra.mxu0 0.0
    %1405 = vmatpush.msra.mxu0 %v278
    %1406 = vmatpush.msra.mxu0 %v277
    %1407 = vmatpush.msra.mxu0 %v276
    %1408 = vmatpush.msra.mxu0 %v275
    %1409 = vmatmul.f32.gmra.mxu0 %v1391
    %v1410 = vpop.f32.mrf.mxu0
    %v1411 = vadd.f32 0.0, %v1410
    %1412 = vdwg.mxu0
    %v1414 = vrot.slane %v1386, 2
    %v1416 = vadd.f32 %v1414, %v1411
    %v1417 = vxor.u32 %v1416, 2147483648
    %v1418 = vmul.f32 %v1417, 1.442695
    %v1419 = vpow.pop %v1418
    %v1420 = vadd.f32 %v1419, 1.0
    %v1421 = vrcp.pop %v1420
    %v1422 = vmul.f32 %v1420, %v1421
    %v1423 = vsub.f32 1.0, %v1422
    %v1424 = vmul.f32 %v1421, %v1423
    %v1425 = vadd.f32 %v1421, %v1424
    %vm1426 = vweird.f32 %v1420
    %vm1427 = vweird.f32 %v1421
    %vm1428 = vmor %vm1426, %vm1427
    %v1429 = vsel %vm1428, %v1421, %v1425
    %v1430 = vand.u32 2147483647, %v1420
    %vm1431 = vcmp.eq.f32.partialorder %v1430, 8.507059e+37
    %v1432 = vand.u32 %v1420, 2147483648
    %v1433 = vor.u32 1.1754944e-38, %v1432
    %v1434 = vsel %vm1431, %v1433, %v1429
    %v1435 = vmul.f32 1.0, %v1434
    %v1436 = vtanh.pop %v1416
    %v1437 = vmul.f32 %v1435, %v1298
    %1439 = vrot.lane.b32.xlu0 %v1436, 64
    %v1440 = vpop.permute.xlu0 %1439
    %v1442 = vmul.f32 %v1435, %v1440
    %1444 = vrot.lane.b32.xlu0 %v1442, 32
    %v1445 = vpop.permute.xlu0 %1444
    %v1447 = vadd.f32 %v1437, %v1445
    %v1448 = vtanh.pop %v1447
    %1450 = vrot.lane.b32.xlu0 %v1448, 64
    %v1451 = vpop.permute.xlu0 %1450
    %v1453 = vmul.f32 %v1435, %v1451
    %1455 = vst [vmem:[#allocation1] ss:$4 sm:$0xff] %v1385
    %v1456 = vld.sshfl [vmem:[#allocation1] sm:$0xff pattern:$0x73625140]
    %1457 = vrot.lane.b32.xlu0 %v1456, 32
    %v1458 = vpop.permute.xlu0 %1457
    %s1460 = scalar_lea.vmem [#allocation3], 14
    %1461 = vst.msk [vmem:[%s1460] sm:$0x3] %vm411, %v1458
    %1463 = vst [vmem:[#allocation1] ss:$4 sm:$0xff] %v1453
    %v1464 = vld.sshfl [vmem:[#allocation1] sm:$0xff pattern:$0x73625140]
    %1465 = vrot.lane.b32.xlu0 %v1464, 32
    %v1466 = vpop.permute.xlu0 %1465
    %1468 = vst.msk [vmem:[#allocation4] sm:$0x3] %vm411, %v1466
    %v1469 = vld [vmem:[#allocation3] sm:$0x3]
    %v1470 = vld [vmem:[#allocation3 + $0x2] sm:$0x3]
    %v1471 = vld [vmem:[#allocation3 + $0x4] sm:$0x3]
    %v1472 = vld [vmem:[#allocation3 + $0x6] sm:$0x3]
    %v1473 = vld [vmem:[#allocation3 + $0x8] sm:$0x3]
    %v1474 = vld [vmem:[#allocation3 + $0xa] sm:$0x3]
    %v1475 = vld [vmem:[#allocation3 + $0xc] sm:$0x3]
    %v1476 = vld [vmem:[#allocation3 + $0xe] sm:$0x3]
    %v1477 = vld [vmem:[#allocation4] sm:$0x3]
    %v1478 = vld [vmem:[#allocation4 + $0x2] sm:$0x3]
    %v1479 = vld [vmem:[#allocation4 + $0x4] sm:$0x3]
    %v1480 = vld [vmem:[#allocation4 + $0x6] sm:$0x3]
    %v1481 = vld [vmem:[#allocation4 + $0x8] sm:$0x3]
    %v1482 = vld [vmem:[#allocation4 + $0xa] sm:$0x3]
    %v1483 = vld [vmem:[#allocation4 + $0xc] sm:$0x3]
    %v1484 = vld [vmem:[#allocation4 + $0xe] sm:$0x3]
    %v1485 = vld [vmem:[#allocation14] sm:$0xff]
    %v1486 = vld [vmem:[#allocation14 + $0x8] sm:$0xff]
    %v1487 = vld [vmem:[#allocation14 + $0x10] sm:$0xff]
    %v1488 = vld [vmem:[#allocation14 + $0x18] sm:$0xff]
    %v1489 = vld [vmem:[#allocation16] sm:$0xff]
    %v1490 = vld [vmem:[#allocation16 + $0x8] sm:$0xff]
    %v1491 = vld [vmem:[#allocation16 + $0x10] sm:$0xff]
    %v1492 = vld [vmem:[#allocation16 + $0x18] sm:$0xff]
    %1501 = vst [vmem:[#allocation1] ss:$4 sm:$0xff] %v1477
    %s1502 = scalar_lea.vmem [#allocation1], 1
    %1503 = vst [vmem:[%s1502] ss:$4 sm:$0xff] %v1478
    %s1504 = scalar_lea.vmem [#allocation1], 2
    %1505 = vst [vmem:[%s1504] ss:$4 sm:$0xff] %v1479
    %s1506 = scalar_lea.vmem [#allocation1], 3
    %1507 = vst [vmem:[%s1506] ss:$4 sm:$0xff] %v1480
    %s1508 = scalar_lea.vmem [#allocation1], 32
    %1509 = vst [vmem:[%s1508] ss:$4 sm:$0xff] %v1481
    %s1510 = scalar_lea.vmem [#allocation1], 33
    %1511 = vst [vmem:[%s1510] ss:$4 sm:$0xff] %v1482
    %s1512 = scalar_lea.vmem [#allocation1], 34
    %1513 = vst [vmem:[%s1512] ss:$4 sm:$0xff] %v1483
    %s1514 = scalar_lea.vmem [#allocation1], 35
    %1515 = vst [vmem:[%s1514] ss:$4 sm:$0xff] %v1484
    %v1516 = vld.sshfl [vmem:[#allocation1] sm:$0xff pattern:$0x73625140]
    %v1517 = vld.sshfl [vmem:[#allocation1 + $0x20] sm:$0xff pattern:$0x73625140]
    %v1518 = vsel %vm280, %v1516, 0
    %v1520 = vsel %vm280, %v1517, 0
    %1522 = vmatpush.msra.mxu0 0.0
    %1523 = vmatpush.msra.mxu0 0.0
    %1524 = vmatpush.msra.mxu0 0.0
    %1525 = vmatpush.msra.mxu0 0.0
    %1526 = vmatpush.msra.mxu0 0.0
    %1527 = vmatpush.msra.mxu0 0.0
    %1528 = vmatpush.msra.mxu0 0.0
    %1529 = vmatpush.msra.mxu0 0.0
    %1530 = vmatpush.msra.mxu0 0.0
    %1531 = vmatpush.msra.mxu0 0.0
    %1532 = vmatpush.msra.mxu0 0.0
    %1533 = vmatpush.msra.mxu0 0.0
    %1534 = vmatpush.msra.mxu0 %v1492
    %1535 = vmatpush.msra.mxu0 %v1491
    %1536 = vmatpush.msra.mxu0 %v1490
    %1537 = vmatpush.msra.mxu0 %v1489
    %1538 = vmatmul.f32.gmra.mxu0 %v1518
    %v1539 = vpop.f32.mrf.mxu0
    %v1540 = vadd.f32 0.0, %v1539
    %1541 = vmatmul.f32.gmra.mxu0 %v1520
    %v1542 = vpop.f32.mrf.mxu0
    %v1543 = vadd.f32 0.0, %v1542
    %1544 = vdwg.mxu0
    %1553 = vst [vmem:[#allocation1] ss:$4 sm:$0xff] %v1469
    %s1554 = scalar_lea.vmem [#allocation1], 1
    %1555 = vst [vmem:[%s1554] ss:$4 sm:$0xff] %v1470
    %s1556 = scalar_lea.vmem [#allocation1], 2
    %1557 = vst [vmem:[%s1556] ss:$4 sm:$0xff] %v1471
    %s1558 = scalar_lea.vmem [#allocation1], 3
    %1559 = vst [vmem:[%s1558] ss:$4 sm:$0xff] %v1472
    %s1560 = scalar_lea.vmem [#allocation1], 32
    %1561 = vst [vmem:[%s1560] ss:$4 sm:$0xff] %v1473
    %s1562 = scalar_lea.vmem [#allocation1], 33
    %1563 = vst [vmem:[%s1562] ss:$4 sm:$0xff] %v1474
    %s1564 = scalar_lea.vmem [#allocation1], 34
    %1565 = vst [vmem:[%s1564] ss:$4 sm:$0xff] %v1475
    %s1566 = scalar_lea.vmem [#allocation1], 35
    %1567 = vst [vmem:[%s1566] ss:$4 sm:$0xff] %v1476
    %v1568 = vld.sshfl [vmem:[#allocation1] sm:$0xff pattern:$0x73625140]
    %v1569 = vld.sshfl [vmem:[#allocation1 + $0x20] sm:$0xff pattern:$0x73625140]
    %v1570 = vsel %vm280, %v1568, 0
    %v1572 = vsel %vm280, %v1569, 0
    %1574 = vmatpush.msra.mxu0 0.0
    %1575 = vmatpush.msra.mxu0 0.0
    %1576 = vmatpush.msra.mxu0 0.0
    %1577 = vmatpush.msra.mxu0 0.0
    %1578 = vmatpush.msra.mxu0 0.0
    %1579 = vmatpush.msra.mxu0 0.0
    %1580 = vmatpush.msra.mxu0 0.0
    %1581 = vmatpush.msra.mxu0 0.0
    %1582 = vmatpush.msra.mxu0 0.0
    %1583 = vmatpush.msra.mxu0 0.0
    %1584 = vmatpush.msra.mxu0 0.0
    %1585 = vmatpush.msra.mxu0 0.0
    %1586 = vmatpush.msra.mxu0 %v1488
    %1587 = vmatpush.msra.mxu0 %v1487
    %1588 = vmatpush.msra.mxu0 %v1486
    %1589 = vmatpush.msra.mxu0 %v1485
    %1590 = vmatmul.f32.gmra.mxu0 %v1570
    %v1591 = vpop.f32.mrf.mxu0
    %v1592 = vadd.f32 %v1540, %v1591
    %1593 = vmatmul.f32.gmra.mxu0 %v1572
    %v1594 = vpop.f32.mrf.mxu0
    %v1595 = vadd.f32 %v1543, %v1594
    %1596 = vdwg.mxu0
    %v1597 = vld [vmem:[%s7] sm:$0x1]
    %v1599 = vperm.slane %v1597, 0
    %v1601 = vadd.f32 %v1592, %v1599
    %v1602 = vadd.f32 %v1595, %v1599
    %1603 = vmax.xlane.f32.xlu0 %v1601
    %v1604 = vpop.xlane.xlu0 %1603
    %1605 = vmax.xlane.f32.xlu0 %v1602
    %v1606 = vpop.xlane.xlu0 %1605
    %v1607 = vsub.f32 %v1601, %v1604
    %v1608 = vsub.f32 %v1602, %v1606
    %v1609 = vmul.f32 %v1607, 1.442695
    %v1610 = vpow.pop %v1609
    %v1611 = vmul.f32 %v1608, 1.442695
    %v1612 = vpow.pop %v1611
    %1613 = vadd.xlane.f32.xlu0 %v1610
    %v1614 = vpop.xlane.xlu0 %1613
    %1615 = vadd.xlane.f32.xlu0 %v1612
    %v1616 = vpop.xlane.xlu0 %1615
    %v1617 = vrcp.pop %v1614
    %v1618 = vrcp.pop %v1616
    %v1619 = vmul.f32 %v1610, %v1617
    %v1620 = vmul.f32 %v1612, %v1618
    %1621 = vst [vmem:[#allocation17] sm:$0xff] %v1619
    %1622 = vst [vmem:[#allocation17 + $0x8] sm:$0xff] %v1620
    // Predicated region
    $region62: #{tpu_custom_call.1} parent=1 // pred_check
      _
    $region63: #{tpu_custom_call.1} parent=1 // pred_check_branch
      %1624 = sbr.rel (0) target = $region65
    $region64: #{tpu_custom_call.1} parent=1 // pred_region
      %1626 = vsyncadd [#allocation7], 0
      %s1627 = sshll.u32 [#allocation17], 4
      %s1628 = int_to_ptr.vmem [resolvable:$true] %s1627
      %s1629 = sshll.u32 %s8, 4
      %s1630 = int_to_ptr.hbm [resolvable:$true] %s1629
      %1635 = dma.vmem_to_hbm [thread:$0]  %s1628, 256, %s1630, [#allocation7], 128, 128, 8
    $region65: #{tpu_custom_call.1} parent=1 // pred_fallthru
      _
    // Predicated region
    $region66: #{tpu_custom_call.1} parent=1 // pred_check
      _
    $region67: #{tpu_custom_call.1} parent=1 // pred_check_branch
      %1637 = sbr.rel (0) target = $region69
    $region68: #{tpu_custom_call.1} parent=1 // pred_region
      %1639 = dma.done [#allocation7], 256
    $region69: #{tpu_custom_call.1} parent=1 // pred_fallthru
      _
    %1640 = vsyncpa [#allocation6], 1
    %1641 = vsyncpa [#allocation9], 1
    %1642 = vsyncpa [#allocation12], 1
    %1643 = vsyncpa [#allocation15], 1
    %1644 = vsyncpa [#allocation7], 1

</llo_original>
